<compile_context>
chip_gen: v7x
topology: tpu7x:2x2x1
jax: 0.10.0
libtpu: 0.0.40
codegen_flags: <defaults>
</compile_context>

<pallas_src>
import functools

import jax
import jax.numpy as jnp
from jax.experimental import pallas as pl
from jax.experimental.pallas import tpu as pltpu

LN_EPS = 1e-5   # PyTorch nn.LayerNorm default
LANE = 128


def _round_up(n, m):
    return ((n + m - 1) // m) * m


def _layernorm(h, gamma, beta):
    # PyTorch LayerNorm (biased variance), one-pass stats: the two reductions
    # (E[h], E[h^2]) are independent -> better ILP, one fewer VPU pass.
    mean = jnp.mean(h, axis=-1, keepdims=True)
    mean_sq = jnp.mean(h * h, axis=-1, keepdims=True)
    var = mean_sq - mean * mean
    inv = jax.lax.rsqrt(var + LN_EPS)
    return (h - mean) * inv * gamma + beta


def _mm(a, w_ref, b_ref):
    # MXU matmul: operands in the weight dtype (bf16 on the fast path),
    # f32 accumulation, f32 bias add on the VPU.
    return (
        jnp.dot(a.astype(w_ref.dtype), w_ref[...], preferred_element_type=jnp.float32)
        + b_ref[...]
    )


def vae_kernel(
    # row-tiled inputs
    x_ref, eps_ref,
    # resident weights / biases (encoder, fused+padded mu|logv head, decoder)
    ew1_ref, eb1_ref, ew2_ref, eb2_ref, elng_ref, elnb_ref,
    wml_ref, bml_ref,
    dw1_ref, db1_ref, dw2_ref, db2_ref, dlng_ref, dlnb_ref, dw3_ref, db3_ref,
    # packed, 128-aligned output: [xr | z | mu | logv]
    out_ref,
    *, lat_pad, in_pad,
):
    x = x_ref[...]                                   # (TB, in_dim)  io_dtype
    eps = eps_ref[...].astype(jnp.float32)           # (TB, LAT_PAD) -> f32 VPU math

    # ----- VariationalEncoder / EncoderBlock -----
    h = jnp.maximum(_mm(x, ew1_ref, eb1_ref), 0.0)           # relu(fc1)
    h = _mm(h, ew2_ref, eb2_ref)                             # fc2
    h = _layernorm(h, elng_ref[...], elnb_ref[...])          # ln

    ml = _mm(h, wml_ref, bml_ref)                            # fused mu|logv head
    mu = ml[:, :lat_pad]                                     # 128-aligned view
    logv = ml[:, lat_pad:]                                   # 128-aligned view
    z = mu + eps * jnp.exp(0.5 * logv)                       # reparameterization

    # ----- Decoder -----
    d = jnp.maximum(_mm(z, dw1_ref, db1_ref), 0.0)           # relu(fc1)
    d = jnp.maximum(_mm(d, dw2_ref, db2_ref), 0.0)           # relu(fc2)
    d = _layernorm(d, dlng_ref[...], dlnb_ref[...])          # ln
    xr = _mm(d, dw3_ref, db3_ref)                            # fc3 (N padded to IN_PAD)

    # Direct aligned stores into the packed slab (no concatenate).
    od = out_ref.dtype
    out_ref[:, :in_pad] = xr.astype(od)
    out_ref[:, in_pad:in_pad + lat_pad] = z.astype(od)
    out_ref[:, in_pad + lat_pad:in_pad + 2 * lat_pad] = mu.astype(od)
    out_ref[:, in_pad + 2 * lat_pad:] = logv.astype(od)


def _vmem_limit_bytes():
    """Generation-aware scoped-VMEM limit with headroom."""
    try:
        info = pltpu.get_tpu_info()
        cap = getattr(info, "vmem_capacity_bytes", None)
        if cap:
            # ~96 MiB on v5e/v6e (128 MiB), ~48 MiB on v7x (64 MiB).
            return int(min(int(0.75 * int(cap)), 100 * 1024 * 1024))
    except Exception:
        pass
    return 48 * 1024 * 1024


def vae_forward(
    x, eps, params, *,
    block_rows=512,
    matmul_dtype=jnp.bfloat16,
    io_dtype=jnp.bfloat16,
    out_dtype=jnp.float32,
):
    """x: (B, in_dim), eps: (B, lat_dim), params: dict of f32 arrays."""
    B, in_dim = x.shape
    lat_dim = eps.shape[1]
    hid_dim = params["enc_w1"].shape[1]

    in_pad = _round_up(in_dim, LANE)
    lat_pad = _round_up(lat_dim, LANE)
    out_w = in_pad + 3 * lat_pad          # packed [xr | z | mu | logv], 128-aligned

    def wcast(a):
        return a.astype(matmul_dtype)

    # Fused mu|logv head, each half zero-padded to a 128-lane segment so the
    # in-kernel split lands on vreg tile boundaries.
    w_mu = jnp.pad(params["w_mu"], ((0, 0), (0, lat_pad - lat_dim)))
    w_lv = jnp.pad(params["w_logv"], ((0, 0), (0, lat_pad - lat_dim)))
    b_mu = jnp.pad(params["b_mu"], ((0, 0), (0, lat_pad - lat_dim)))
    b_lv = jnp.pad(params["b_logv"], ((0, 0), (0, lat_pad - lat_dim)))
    w_ml = jnp.concatenate([w_mu, w_lv], axis=1)
    b_ml = jnp.concatenate([b_mu, b_lv], axis=1)

    # Decoder fc1 takes padded z (extra K rows are zero); fc3 output padded to IN_PAD.
    dec_w1 = jnp.pad(params["dec_w1"], ((0, lat_pad - lat_dim), (0, 0)))
    dec_w3 = jnp.pad(params["dec_w3"], ((0, 0), (0, in_pad - in_dim)))
    dec_b3 = jnp.pad(params["dec_b3"], ((0, 0), (0, in_pad - in_dim)))

    weights = (
        wcast(params["enc_w1"]), params["enc_b1"],
        wcast(params["enc_w2"]), params["enc_b2"],
        params["enc_ln_g"], params["enc_ln_b"],
        wcast(w_ml), b_ml,
        wcast(dec_w1), params["dec_b1"],
        wcast(params["dec_w2"]), params["dec_b2"],
        params["dec_ln_g"], params["dec_ln_b"],
        wcast(dec_w3), dec_b3,
    )

    io_bytes = jnp.dtype(io_dtype).itemsize
    out_bytes = jnp.dtype(out_dtype).itemsize
    weight_bytes = sum(int(w.size) * w.dtype.itemsize for w in weights)
    vmem_limit = _vmem_limit_bytes()

    # Batch tile: multiple of 8 (f32 sublane); shrink until the estimated
    # footprint (3x row buffers + 2x weights, worst case) fits with headroom.
    TB = _round_up(min(block_rows, _round_up(B, 8)), 8)

    def step_vmem(tb):
        rows = tb * (in_dim + lat_pad) * io_bytes + tb * out_w * out_bytes
        return 3 * rows + 2 * weight_bytes

    while TB > 8 and step_vmem(TB) > int(0.8 * vmem_limit):
        TB = max(8, _round_up(TB // 2, 8))

    Bp = _round_up(B, TB)
    x = jnp.pad(x, ((0, Bp - B), (0, 0))).astype(io_dtype)
    eps = jnp.pad(eps, ((0, Bp - B), (0, lat_pad - lat_dim))).astype(io_dtype)
    grid = (Bp // TB,)

    flops = 2 * Bp * (
        in_dim * hid_dim            # enc fc1
        + hid_dim * hid_dim         # enc fc2
        + hid_dim * 2 * lat_pad     # fused mu|logv
        + lat_pad * hid_dim         # dec fc1
        + hid_dim * hid_dim         # dec fc2
        + hid_dim * in_pad          # dec fc3
    )
    bytes_accessed = int(
        int(x.size) * io_bytes + int(eps.size) * io_bytes
        + weight_bytes + Bp * out_w * out_bytes
    )
    cost = pl.CostEstimate(
        flops=flops, transcendentals=Bp * lat_pad, bytes_accessed=bytes_accessed
    )

    kernel = functools.partial(vae_kernel, lat_pad=lat_pad, in_pad=in_pad)

    def build(use_buffered):
        row_kw = {"pipeline_mode": pl.Buffered(3)} if use_buffered else {}
        const_kw = {"pipeline_mode": pl.Buffered(1)} if use_buffered else {}

        def row_spec(feat):
            return pl.BlockSpec((TB, feat), lambda i: (i, 0), **row_kw)

        def const_spec(a):
            # Whole array resident in VMEM, same block every grid step.
            return pl.BlockSpec(a.shape, lambda i: (0, 0), **const_kw)

        in_specs = [row_spec(in_dim), row_spec(lat_pad)] + [
            const_spec(w) for w in weights
        ]
        out_spec = pl.BlockSpec((TB, out_w), lambda i: (i, 0), **row_kw)

        return pl.pallas_call(
            kernel,
            out_shape=jax.ShapeDtypeStruct((Bp, out_w), out_dtype),
            grid=grid,
            in_specs=in_specs,
            out_specs=out_spec,
            compiler_params=pltpu.CompilerParams(
                dimension_semantics=("parallel",),
                vmem_limit_bytes=vmem_limit,
            ),
            cost_estimate=cost,
        )

    try:
        out = build(True)(x, eps, *weights)
    except Exception:
        # TODO(synk): pl.Buffered pipeline_mode unsupported on this jax/libtpu;
        # fall back to default double-buffering (same correctness, same tiling).
        out = build(False)(x, eps, *weights)

    out = out[:B].astype(jnp.float32)
    xr = out[:, :in_dim]
    z = out[:, in_pad:in_pad + lat_dim]
    mu = out[:, in_pad + lat_pad:in_pad + lat_pad + lat_dim]
    logv = out[:, in_pad + 2 * lat_pad:in_pad + 2 * lat_pad + lat_dim]
    return xr, z, mu, logv


def init_params(key, in_dim, hid_dim, lat_dim):
    """Deterministic synthetic init.  Linear weights are stored (in, out)."""
    ks = jax.random.split(key, 10)

    def lin(k, fan_in, fan_out):
        bound = 1.0 / jnp.sqrt(fan_in)
        kw, kb = jax.random.split(k)
        w = jax.random.uniform(kw, (fan_in, fan_out), jnp.float32, -bound, bound)
        b = jax.random.uniform(kb, (1, fan_out), jnp.float32, -bound, bound)
        return w, b

    p = {}
    p["enc_w1"], p["enc_b1"] = lin(ks[0], in_dim, hid_dim)
    p["enc_w2"], p["enc_b2"] = lin(ks[1], hid_dim, hid_dim)
    p["enc_ln_g"] = jnp.ones((1, hid_dim), jnp.float32)
    p["enc_ln_b"] = jnp.zeros((1, hid_dim), jnp.float32)
    p["w_mu"], p["b_mu"] = lin(ks[2], hid_dim, lat_dim)
    p["w_logv"], p["b_logv"] = lin(ks[3], hid_dim, lat_dim)
    p["dec_w1"], p["dec_b1"] = lin(ks[4], lat_dim, hid_dim)
    p["dec_w2"], p["dec_b2"] = lin(ks[5], hid_dim, hid_dim)
    p["dec_ln_g"] = jnp.ones((1, hid_dim), jnp.float32)
    p["dec_ln_b"] = jnp.zeros((1, hid_dim), jnp.float32)
    p["dec_w3"], p["dec_b3"] = lin(ks[6], hid_dim, in_dim)
    return p


def reference_forward(x, eps, p):
    """Pure-JAX f32 reference of the same forward."""
    def ln(h, g, b):
        m = jnp.mean(h, -1, keepdims=True)
        v = jnp.mean((h - m) ** 2, -1, keepdims=True)
        return (h - m) / jnp.sqrt(v + LN_EPS) * g + b

    h = jnp.maximum(x @ p["enc_w1"] + p["enc_b1"], 0.0)
    h = ln(h @ p["enc_w2"] + p["enc_b2"], p["enc_ln_g"], p["enc_ln_b"])
    mu = h @ p["w_mu"] + p["b_mu"]
    logv = h @ p["w_logv"] + p["b_logv"]
    z = mu + eps * jnp.exp(0.5 * logv)
    d = jnp.maximum(z @ p["dec_w1"] + p["dec_b1"], 0.0)
    d = jnp.maximum(d @ p["dec_w2"] + p["dec_b2"], 0.0)
    d = ln(d, p["dec_ln_g"], p["dec_ln_b"])
    xr = d @ p["dec_w3"] + p["dec_b3"]
    return xr, z, mu, logv


if __name__ == "__main__":
    # Small shapes; B=20 with block_rows=8 exercises the batch grid (3 tiles)
    # and the batch/feature-padding paths.
    B, in_dim, hid_dim, lat_dim = 20, 32, 32, 16

    key = jax.random.PRNGKey(0)
    kx, keps, kp = jax.random.split(key, 3)
    x = jax.random.normal(kx, (B, in_dim), jnp.float32)
    eps = jax.random.normal(keps, (B, lat_dim), jnp.float32)  # reparam noise
    params = init_params(kp, in_dim, hid_dim, lat_dim)

    ref = reference_forward(x, eps, params)

    # Exact-semantics path (f32 MXU operands, f32 row I/O) — tight tolerance.
    out_f32 = jax.block_until_ready(
        vae_forward(x, eps, params, block_rows=8,
                    matmul_dtype=jnp.float32, io_dtype=jnp.float32)
    )
    for a, r in zip(out_f32, ref):
        assert a.shape == r.shape
        assert jnp.allclose(a, r, atol=2e-4, rtol=2e-4)

    # Fast path (bf16 MXU operands + bf16 row I/O, f32 accumulation & output).
    out_bf16 = jax.block_until_ready(
        vae_forward(x, eps, params, block_rows=8,
                    matmul_dtype=jnp.bfloat16, io_dtype=jnp.bfloat16)
    )
    for a, r in zip(out_bf16, ref):
        assert a.shape == r.shape
        assert jnp.allclose(a, r, atol=5e-2, rtol=5e-2)

    print("KERNEL_OK")
</pallas_src>

<mosaic_0001>
module attributes {stable_mosaic.version = 11 : i64} {
  func.func @vae_kernel(%arg0: i32, %arg1: memref<8x32xf32, #tpu.memory_space<vmem>>, %arg2: memref<8x128xf32, #tpu.memory_space<vmem>>, %arg3: memref<32x32xf32, #tpu.memory_space<vmem>>, %arg4: memref<1x32xf32, #tpu.memory_space<vmem>>, %arg5: memref<32x32xf32, #tpu.memory_space<vmem>>, %arg6: memref<1x32xf32, #tpu.memory_space<vmem>>, %arg7: memref<1x32xf32, #tpu.memory_space<vmem>>, %arg8: memref<1x32xf32, #tpu.memory_space<vmem>>, %arg9: memref<32x256xf32, #tpu.memory_space<vmem>>, %arg10: memref<1x256xf32, #tpu.memory_space<vmem>>, %arg11: memref<128x32xf32, #tpu.memory_space<vmem>>, %arg12: memref<1x32xf32, #tpu.memory_space<vmem>>, %arg13: memref<32x32xf32, #tpu.memory_space<vmem>>, %arg14: memref<1x32xf32, #tpu.memory_space<vmem>>, %arg15: memref<1x32xf32, #tpu.memory_space<vmem>>, %arg16: memref<1x32xf32, #tpu.memory_space<vmem>>, %arg17: memref<32x128xf32, #tpu.memory_space<vmem>>, %arg18: memref<1x128xf32, #tpu.memory_space<vmem>>, %arg19: memref<8x512xf32, #tpu.memory_space<vmem>>) attributes {dimension_semantics = [#tpu.dimension_semantics<parallel>], iteration_bounds = array<i64: 3>, scalar_prefetch = 0 : i64, scratch_operands = 0 : i64, tpu.core_type = #tpu.core_type<tc>, window_params = [{transform_indices = @transform_0, window_bounds = array<i64: 8, 32>}, {transform_indices = @transform_1, window_bounds = array<i64: 8, 128>}, {pipeline_mode = #tpu.pipeline_mode<synchronous>, transform_indices = @transform_2, window_bounds = array<i64: 32, 32>}, {pipeline_mode = #tpu.pipeline_mode<synchronous>, transform_indices = @transform_3, window_bounds = array<i64: 1, 32>}, {pipeline_mode = #tpu.pipeline_mode<synchronous>, transform_indices = @transform_4, window_bounds = array<i64: 32, 32>}, {pipeline_mode = #tpu.pipeline_mode<synchronous>, transform_indices = @transform_5, window_bounds = array<i64: 1, 32>}, {pipeline_mode = #tpu.pipeline_mode<synchronous>, transform_indices = @transform_6, window_bounds = array<i64: 1, 32>}, {pipeline_mode = #tpu.pipeline_mode<synchronous>, transform_indices = @transform_7, window_bounds = array<i64: 1, 32>}, {pipeline_mode = #tpu.pipeline_mode<synchronous>, transform_indices = @transform_8, window_bounds = array<i64: 32, 256>}, {pipeline_mode = #tpu.pipeline_mode<synchronous>, transform_indices = @transform_9, window_bounds = array<i64: 1, 256>}, {pipeline_mode = #tpu.pipeline_mode<synchronous>, transform_indices = @transform_10, window_bounds = array<i64: 128, 32>}, {pipeline_mode = #tpu.pipeline_mode<synchronous>, transform_indices = @transform_11, window_bounds = array<i64: 1, 32>}, {pipeline_mode = #tpu.pipeline_mode<synchronous>, transform_indices = @transform_12, window_bounds = array<i64: 32, 32>}, {pipeline_mode = #tpu.pipeline_mode<synchronous>, transform_indices = @transform_13, window_bounds = array<i64: 1, 32>}, {pipeline_mode = #tpu.pipeline_mode<synchronous>, transform_indices = @transform_14, window_bounds = array<i64: 1, 32>}, {pipeline_mode = #tpu.pipeline_mode<synchronous>, transform_indices = @transform_15, window_bounds = array<i64: 1, 32>}, {pipeline_mode = #tpu.pipeline_mode<synchronous>, transform_indices = @transform_16, window_bounds = array<i64: 32, 128>}, {pipeline_mode = #tpu.pipeline_mode<synchronous>, transform_indices = @transform_17, window_bounds = array<i64: 1, 128>}, {transform_indices = @transform_18, window_bounds = array<i64: 8, 512>}]} {
    %c0 = arith.constant 0 : index
    %c0_0 = arith.constant 0 : index
    %0 = vector.load %arg1[%c0, %c0_0] : memref<8x32xf32, #tpu.memory_space<vmem>>, vector<8x32xf32>
    %c0_1 = arith.constant 0 : index
    %c0_2 = arith.constant 0 : index
    %1 = vector.load %arg2[%c0_1, %c0_2] : memref<8x128xf32, #tpu.memory_space<vmem>>, vector<8x128xf32>
    %c0_3 = arith.constant 0 : index
    %c0_4 = arith.constant 0 : index
    %2 = vector.load %arg3[%c0_3, %c0_4] : memref<32x32xf32, #tpu.memory_space<vmem>>, vector<32x32xf32>
    %cst = arith.constant dense<0.000000e+00> : vector<8x32xf32>
    %3 = tpu.matmul %0, %2, %cst {dimension_numbers = #tpu.dot_dimension_numbers<[1], [0], [0], [1], [0, 0, 1, 1], [], []>} : vector<8x32xf32>, vector<32x32xf32>, vector<8x32xf32> -> vector<8x32xf32>
    %c0_5 = arith.constant 0 : index
    %c0_6 = arith.constant 0 : index
    %4 = vector.load %arg4[%c0_5, %c0_6] : memref<1x32xf32, #tpu.memory_space<vmem>>, vector<1x32xf32>
    %5 = vector.broadcast %4 : vector<1x32xf32> to vector<8x32xf32>
    %6 = arith.addf %3, %5 : vector<8x32xf32>
    %cst_7 = arith.constant 0.000000e+00 : f32
    %7 = vector.broadcast %cst_7 : f32 to vector<8x32xf32>
    %8 = arith.maximumf %6, %7 : vector<8x32xf32>
    %c0_8 = arith.constant 0 : index
    %c0_9 = arith.constant 0 : index
    %9 = vector.load %arg5[%c0_8, %c0_9] : memref<32x32xf32, #tpu.memory_space<vmem>>, vector<32x32xf32>
    %cst_10 = arith.constant dense<0.000000e+00> : vector<8x32xf32>
    %10 = tpu.matmul %8, %9, %cst_10 {dimension_numbers = #tpu.dot_dimension_numbers<[1], [0], [0], [1], [0, 0, 1, 1], [], []>} : vector<8x32xf32>, vector<32x32xf32>, vector<8x32xf32> -> vector<8x32xf32>
    %c0_11 = arith.constant 0 : index
    %c0_12 = arith.constant 0 : index
    %11 = vector.load %arg6[%c0_11, %c0_12] : memref<1x32xf32, #tpu.memory_space<vmem>>, vector<1x32xf32>
    %12 = vector.broadcast %11 : vector<1x32xf32> to vector<8x32xf32>
    %13 = arith.addf %10, %12 : vector<8x32xf32>
    %c0_13 = arith.constant 0 : index
    %c0_14 = arith.constant 0 : index
    %14 = vector.load %arg7[%c0_13, %c0_14] : memref<1x32xf32, #tpu.memory_space<vmem>>, vector<1x32xf32>
    %c0_15 = arith.constant 0 : index
    %c0_16 = arith.constant 0 : index
    %15 = vector.load %arg8[%c0_15, %c0_16] : memref<1x32xf32, #tpu.memory_space<vmem>>, vector<1x32xf32>
    %cst_17 = arith.constant dense<0.000000e+00> : vector<8xf32>
    %16 = vector.multi_reduction <add>, %13, %cst_17 [1] : vector<8x32xf32> to vector<8xf32>
    %17 = vector.shape_cast %16 : vector<8xf32> to vector<8x1xf32>
    %cst_18 = arith.constant 3.200000e+01 : f32
    %18 = vector.broadcast %cst_18 : f32 to vector<8x1xf32>
    %19 = arith.divf %17, %18 : vector<8x1xf32>
    %20 = arith.mulf %13, %13 : vector<8x32xf32>
    %cst_19 = arith.constant dense<0.000000e+00> : vector<8xf32>
    %21 = vector.multi_reduction <add>, %20, %cst_19 [1] : vector<8x32xf32> to vector<8xf32>
    %22 = vector.shape_cast %21 : vector<8xf32> to vector<8x1xf32>
    %cst_20 = arith.constant 3.200000e+01 : f32
    %23 = vector.broadcast %cst_20 : f32 to vector<8x1xf32>
    %24 = arith.divf %22, %23 : vector<8x1xf32>
    %25 = arith.mulf %19, %19 : vector<8x1xf32>
    %26 = arith.subf %24, %25 : vector<8x1xf32>
    %cst_21 = arith.constant 9.99999974E-6 : f32
    %27 = vector.broadcast %cst_21 : f32 to vector<8x1xf32>
    %28 = arith.addf %26, %27 : vector<8x1xf32>
    %29 = math.rsqrt %28 : vector<8x1xf32>
    %30 = vector.broadcast %19 : vector<8x1xf32> to vector<8x32xf32>
    %31 = arith.subf %13, %30 : vector<8x32xf32>
    %32 = vector.broadcast %29 : vector<8x1xf32> to vector<8x32xf32>
    %33 = arith.mulf %31, %32 : vector<8x32xf32>
    %34 = vector.broadcast %14 : vector<1x32xf32> to vector<8x32xf32>
    %35 = arith.mulf %33, %34 : vector<8x32xf32>
    %36 = vector.broadcast %15 : vector<1x32xf32> to vector<8x32xf32>
    %37 = arith.addf %35, %36 : vector<8x32xf32>
    %c0_22 = arith.constant 0 : index
    %c0_23 = arith.constant 0 : index
    %38 = vector.load %arg9[%c0_22, %c0_23] : memref<32x256xf32, #tpu.memory_space<vmem>>, vector<32x256xf32>
    %cst_24 = arith.constant dense<0.000000e+00> : vector<8x256xf32>
    %39 = tpu.matmul %37, %38, %cst_24 {dimension_numbers = #tpu.dot_dimension_numbers<[1], [0], [0], [1], [0, 0, 1, 1], [], []>} : vector<8x32xf32>, vector<32x256xf32>, vector<8x256xf32> -> vector<8x256xf32>
    %c0_25 = arith.constant 0 : index
    %c0_26 = arith.constant 0 : index
    %40 = vector.load %arg10[%c0_25, %c0_26] : memref<1x256xf32, #tpu.memory_space<vmem>>, vector<1x256xf32>
    %41 = vector.broadcast %40 : vector<1x256xf32> to vector<8x256xf32>
    %42 = arith.addf %39, %41 : vector<8x256xf32>
    %43 = vector.extract_strided_slice %42 {offsets = [0, 0], sizes = [8, 128], strides = [1, 1]} : vector<8x256xf32> to vector<8x128xf32>
    %44 = vector.extract_strided_slice %42 {offsets = [0, 128], sizes = [8, 128], strides = [1, 1]} : vector<8x256xf32> to vector<8x128xf32>
    %cst_27 = arith.constant 5.000000e-01 : f32
    %45 = vector.broadcast %cst_27 : f32 to vector<8x128xf32>
    %46 = arith.mulf %45, %44 : vector<8x128xf32>
    %47 = math.exp %46 : vector<8x128xf32>
    %48 = arith.mulf %1, %47 : vector<8x128xf32>
    %49 = arith.addf %43, %48 : vector<8x128xf32>
    %c0_28 = arith.constant 0 : index
    %c0_29 = arith.constant 0 : index
    %50 = vector.load %arg11[%c0_28, %c0_29] : memref<128x32xf32, #tpu.memory_space<vmem>>, vector<128x32xf32>
    %cst_30 = arith.constant dense<0.000000e+00> : vector<8x32xf32>
    %51 = tpu.matmul %49, %50, %cst_30 {dimension_numbers = #tpu.dot_dimension_numbers<[1], [0], [0], [1], [0, 0, 1, 1], [], []>} : vector<8x128xf32>, vector<128x32xf32>, vector<8x32xf32> -> vector<8x32xf32>
    %c0_31 = arith.constant 0 : index
    %c0_32 = arith.constant 0 : index
    %52 = vector.load %arg12[%c0_31, %c0_32] : memref<1x32xf32, #tpu.memory_space<vmem>>, vector<1x32xf32>
    %53 = vector.broadcast %52 : vector<1x32xf32> to vector<8x32xf32>
    %54 = arith.addf %51, %53 : vector<8x32xf32>
    %cst_33 = arith.constant 0.000000e+00 : f32
    %55 = vector.broadcast %cst_33 : f32 to vector<8x32xf32>
    %56 = arith.maximumf %54, %55 : vector<8x32xf32>
    %c0_34 = arith.constant 0 : index
    %c0_35 = arith.constant 0 : index
    %57 = vector.load %arg13[%c0_34, %c0_35] : memref<32x32xf32, #tpu.memory_space<vmem>>, vector<32x32xf32>
    %cst_36 = arith.constant dense<0.000000e+00> : vector<8x32xf32>
    %58 = tpu.matmul %56, %57, %cst_36 {dimension_numbers = #tpu.dot_dimension_numbers<[1], [0], [0], [1], [0, 0, 1, 1], [], []>} : vector<8x32xf32>, vector<32x32xf32>, vector<8x32xf32> -> vector<8x32xf32>
    %c0_37 = arith.constant 0 : index
    %c0_38 = arith.constant 0 : index
    %59 = vector.load %arg14[%c0_37, %c0_38] : memref<1x32xf32, #tpu.memory_space<vmem>>, vector<1x32xf32>
    %60 = vector.broadcast %59 : vector<1x32xf32> to vector<8x32xf32>
    %61 = arith.addf %58, %60 : vector<8x32xf32>
    %cst_39 = arith.constant 0.000000e+00 : f32
    %62 = vector.broadcast %cst_39 : f32 to vector<8x32xf32>
    %63 = arith.maximumf %61, %62 : vector<8x32xf32>
    %c0_40 = arith.constant 0 : index
    %c0_41 = arith.constant 0 : index
    %64 = vector.load %arg15[%c0_40, %c0_41] : memref<1x32xf32, #tpu.memory_space<vmem>>, vector<1x32xf32>
    %c0_42 = arith.constant 0 : index
    %c0_43 = arith.constant 0 : index
    %65 = vector.load %arg16[%c0_42, %c0_43] : memref<1x32xf32, #tpu.memory_space<vmem>>, vector<1x32xf32>
    %cst_44 = arith.constant dense<0.000000e+00> : vector<8xf32>
    %66 = vector.multi_reduction <add>, %63, %cst_44 [1] : vector<8x32xf32> to vector<8xf32>
    %67 = vector.shape_cast %66 : vector<8xf32> to vector<8x1xf32>
    %cst_45 = arith.constant 3.200000e+01 : f32
    %68 = vector.broadcast %cst_45 : f32 to vector<8x1xf32>
    %69 = arith.divf %67, %68 : vector<8x1xf32>
    %70 = arith.mulf %63, %63 : vector<8x32xf32>
    %cst_46 = arith.constant dense<0.000000e+00> : vector<8xf32>
    %71 = vector.multi_reduction <add>, %70, %cst_46 [1] : vector<8x32xf32> to vector<8xf32>
    %72 = vector.shape_cast %71 : vector<8xf32> to vector<8x1xf32>
    %cst_47 = arith.constant 3.200000e+01 : f32
    %73 = vector.broadcast %cst_47 : f32 to vector<8x1xf32>
    %74 = arith.divf %72, %73 : vector<8x1xf32>
    %75 = arith.mulf %69, %69 : vector<8x1xf32>
    %76 = arith.subf %74, %75 : vector<8x1xf32>
    %cst_48 = arith.constant 9.99999974E-6 : f32
    %77 = vector.broadcast %cst_48 : f32 to vector<8x1xf32>
    %78 = arith.addf %76, %77 : vector<8x1xf32>
    %79 = math.rsqrt %78 : vector<8x1xf32>
    %80 = vector.broadcast %69 : vector<8x1xf32> to vector<8x32xf32>
    %81 = arith.subf %63, %80 : vector<8x32xf32>
    %82 = vector.broadcast %79 : vector<8x1xf32> to vector<8x32xf32>
    %83 = arith.mulf %81, %82 : vector<8x32xf32>
    %84 = vector.broadcast %64 : vector<1x32xf32> to vector<8x32xf32>
    %85 = arith.mulf %83, %84 : vector<8x32xf32>
    %86 = vector.broadcast %65 : vector<1x32xf32> to vector<8x32xf32>
    %87 = arith.addf %85, %86 : vector<8x32xf32>
    %c0_49 = arith.constant 0 : index
    %c0_50 = arith.constant 0 : index
    %88 = vector.load %arg17[%c0_49, %c0_50] : memref<32x128xf32, #tpu.memory_space<vmem>>, vector<32x128xf32>
    %cst_51 = arith.constant dense<0.000000e+00> : vector<8x128xf32>
    %89 = tpu.matmul %87, %88, %cst_51 {dimension_numbers = #tpu.dot_dimension_numbers<[1], [0], [0], [1], [0, 0, 1, 1], [], []>} : vector<8x32xf32>, vector<32x128xf32>, vector<8x128xf32> -> vector<8x128xf32>
    %c0_52 = arith.constant 0 : index
    %c0_53 = arith.constant 0 : index
    %90 = vector.load %arg18[%c0_52, %c0_53] : memref<1x128xf32, #tpu.memory_space<vmem>>, vector<1x128xf32>
    %91 = vector.broadcast %90 : vector<1x128xf32> to vector<8x128xf32>
    %92 = arith.addf %89, %91 : vector<8x128xf32>
    %c0_54 = arith.constant 0 : index
    %c0_55 = arith.constant 0 : index
    %93 = vector.load %arg19[%c0_54, %c0_55] : memref<8x512xf32, #tpu.memory_space<vmem>>, vector<8x128xf32>
    tpu.vector_store %arg19[%c0_54, %c0_55], %92 {strides = array<i32>} : memref<8x512xf32, #tpu.memory_space<vmem>>, vector<8x128xf32>,
    %c0_56 = arith.constant 0 : index
    %c128 = arith.constant 128 : index
    %94 = vector.load %arg19[%c0_56, %c128] : memref<8x512xf32, #tpu.memory_space<vmem>>, vector<8x128xf32>
    tpu.vector_store %arg19[%c0_56, %c128], %49 {strides = array<i32>} : memref<8x512xf32, #tpu.memory_space<vmem>>, vector<8x128xf32>,
    %c0_57 = arith.constant 0 : index
    %c256 = arith.constant 256 : index
    %95 = vector.load %arg19[%c0_57, %c256] : memref<8x512xf32, #tpu.memory_space<vmem>>, vector<8x128xf32>
    tpu.vector_store %arg19[%c0_57, %c256], %43 {strides = array<i32>} : memref<8x512xf32, #tpu.memory_space<vmem>>, vector<8x128xf32>,
    %c0_58 = arith.constant 0 : index
    %c384 = arith.constant 384 : index
    %96 = vector.load %arg19[%c0_58, %c384] : memref<8x512xf32, #tpu.memory_space<vmem>>, vector<8x128xf32>
    tpu.vector_store %arg19[%c0_58, %c384], %44 {strides = array<i32>} : memref<8x512xf32, #tpu.memory_space<vmem>>, vector<8x128xf32>,
    return
  }
  func.func @transform_0(%arg0: i32) -> (i32, i32) {
    %c0_i32 = arith.constant 0 : i32
    %c0_i32_0 = arith.constant 0 : i32
    return %arg0, %c0_i32 : i32, i32
  }
  func.func @transform_1(%arg0: i32) -> (i32, i32) {
    %c0_i32 = arith.constant 0 : i32
    %c0_i32_0 = arith.constant 0 : i32
    return %arg0, %c0_i32 : i32, i32
  }
  func.func @transform_2(%arg0: i32) -> (i32, i32) {
    %c0_i32 = arith.constant 0 : i32
    %c0_i32_0 = arith.constant 0 : i32
    %c0_i32_1 = arith.constant 0 : i32
    return %c0_i32, %c0_i32_0 : i32, i32
  }
  func.func @transform_3(%arg0: i32) -> (i32, i32) {
    %c0_i32 = arith.constant 0 : i32
    %c0_i32_0 = arith.constant 0 : i32
    %c0_i32_1 = arith.constant 0 : i32
    return %c0_i32, %c0_i32_0 : i32, i32
  }
  func.func @transform_4(%arg0: i32) -> (i32, i32) {
    %c0_i32 = arith.constant 0 : i32
    %c0_i32_0 = arith.constant 0 : i32
    %c0_i32_1 = arith.constant 0 : i32
    return %c0_i32, %c0_i32_0 : i32, i32
  }
  func.func @transform_5(%arg0: i32) -> (i32, i32) {
    %c0_i32 = arith.constant 0 : i32
    %c0_i32_0 = arith.constant 0 : i32
    %c0_i32_1 = arith.constant 0 : i32
    return %c0_i32, %c0_i32_0 : i32, i32
  }
  func.func @transform_6(%arg0: i32) -> (i32, i32) {
    %c0_i32 = arith.constant 0 : i32
    %c0_i32_0 = arith.constant 0 : i32
    %c0_i32_1 = arith.constant 0 : i32
    return %c0_i32, %c0_i32_0 : i32, i32
  }
  func.func @transform_7(%arg0: i32) -> (i32, i32) {
    %c0_i32 = arith.constant 0 : i32
    %c0_i32_0 = arith.constant 0 : i32
    %c0_i32_1 = arith.constant 0 : i32
    return %c0_i32, %c0_i32_0 : i32, i32
  }
  func.func @transform_8(%arg0: i32) -> (i32, i32) {
    %c0_i32 = arith.constant 0 : i32
    %c0_i32_0 = arith.constant 0 : i32
    %c0_i32_1 = arith.constant 0 : i32
    return %c0_i32, %c0_i32_0 : i32, i32
  }
  func.func @transform_9(%arg0: i32) -> (i32, i32) {
    %c0_i32 = arith.constant 0 : i32
    %c0_i32_0 = arith.constant 0 : i32
    %c0_i32_1 = arith.constant 0 : i32
    return %c0_i32, %c0_i32_0 : i32, i32
  }
  func.func @transform_10(%arg0: i32) -> (i32, i32) {
    %c0_i32 = arith.constant 0 : i32
    %c0_i32_0 = arith.constant 0 : i32
    %c0_i32_1 = arith.constant 0 : i32
    return %c0_i32, %c0_i32_0 : i32, i32
  }
  func.func @transform_11(%arg0: i32) -> (i32, i32) {
    %c0_i32 = arith.constant 0 : i32
    %c0_i32_0 = arith.constant 0 : i32
    %c0_i32_1 = arith.constant 0 : i32
    return %c0_i32, %c0_i32_0 : i32, i32
  }
  func.func @transform_12(%arg0: i32) -> (i32, i32) {
    %c0_i32 = arith.constant 0 : i32
    %c0_i32_0 = arith.constant 0 : i32
    %c0_i32_1 = arith.constant 0 : i32
    return %c0_i32, %c0_i32_0 : i32, i32
  }
  func.func @transform_13(%arg0: i32) -> (i32, i32) {
    %c0_i32 = arith.constant 0 : i32
    %c0_i32_0 = arith.constant 0 : i32
    %c0_i32_1 = arith.constant 0 : i32
    return %c0_i32, %c0_i32_0 : i32, i32
  }
  func.func @transform_14(%arg0: i32) -> (i32, i32) {
    %c0_i32 = arith.constant 0 : i32
    %c0_i32_0 = arith.constant 0 : i32
    %c0_i32_1 = arith.constant 0 : i32
    return %c0_i32, %c0_i32_0 : i32, i32
  }
  func.func @transform_15(%arg0: i32) -> (i32, i32) {
    %c0_i32 = arith.constant 0 : i32
    %c0_i32_0 = arith.constant 0 : i32
    %c0_i32_1 = arith.constant 0 : i32
    return %c0_i32, %c0_i32_0 : i32, i32
  }
  func.func @transform_16(%arg0: i32) -> (i32, i32) {
    %c0_i32 = arith.constant 0 : i32
    %c0_i32_0 = arith.constant 0 : i32
    %c0_i32_1 = arith.constant 0 : i32
    return %c0_i32, %c0_i32_0 : i32, i32
  }
  func.func @transform_17(%arg0: i32) -> (i32, i32) {
    %c0_i32 = arith.constant 0 : i32
    %c0_i32_0 = arith.constant 0 : i32
    %c0_i32_1 = arith.constant 0 : i32
    return %c0_i32, %c0_i32_0 : i32, i32
  }
  func.func @transform_18(%arg0: i32) -> (i32, i32) {
    %c0_i32 = arith.constant 0 : i32
    %c0_i32_0 = arith.constant 0 : i32
    return %arg0, %c0_i32 : i32, i32
  }
}

</mosaic_0001>

<llo_original>
// kernel: tpu_custom_call.1
$region0: #{tpu_custom_call.1}
  #allocation0 [shape = 'u32[]', space=smem, size = 0x4, offset = 0x4, fixed_abs, tag = 'smem constant byte address 0x4 - core index']
  #allocation1 [shape = 'u32[144,128]{1,0:T(1,128)}', space=vmem, size = 0x12000, scoped, tag = 'internal scratch']
  %s0 = inlined_call_operand.hbm [shape: f32[24,32], index: 0, kind: input, shape index: {}]
  %s1 = inlined_call_operand.hbm [shape: f32[24,128], index: 1, kind: input, shape index: {}]
  %s2 = inlined_call_operand.vmem [shape: f32[32,32], index: 2, kind: input, shape index: {}]
  %s3 = inlined_call_operand.vmem [shape: f32[1,32], index: 3, kind: input, shape index: {}]
  %s4 = inlined_call_operand.vmem [shape: f32[32,32], index: 4, kind: input, shape index: {}]
  %s5 = inlined_call_operand.vmem [shape: f32[1,32], index: 5, kind: input, shape index: {}]
  %s6 = inlined_call_operand.vmem [shape: f32[1,32], index: 6, kind: input, shape index: {}]
  %s7 = inlined_call_operand.hbm [shape: f32[1,32], index: 7, kind: input, shape index: {}]
  %s8 = inlined_call_operand.vmem [shape: f32[32,256], index: 8, kind: input, shape index: {}]
  %s9 = inlined_call_operand.vmem [shape: f32[1,256], index: 9, kind: input, shape index: {}]
  %s10 = inlined_call_operand.vmem [shape: f32[128,32], index: 10, kind: input, shape index: {}]
  %s11 = inlined_call_operand.vmem [shape: f32[1,32], index: 11, kind: input, shape index: {}]
  %s12 = inlined_call_operand.vmem [shape: f32[32,32], index: 12, kind: input, shape index: {}]
  %s13 = inlined_call_operand.vmem [shape: f32[1,32], index: 13, kind: input, shape index: {}]
  %s14 = inlined_call_operand.vmem [shape: f32[1,32], index: 14, kind: input, shape index: {}]
  %s15 = inlined_call_operand.vmem [shape: f32[1,32], index: 15, kind: input, shape index: {}]
  %s16 = inlined_call_operand.hbm [shape: f32[32,128], index: 16, kind: input, shape index: {}]
  %s17 = inlined_call_operand.vmem [shape: f32[1,128], index: 17, kind: input, shape index: {}]
  %s18 = inlined_call_operand.hbm [shape: f32[24,512], index: 18, kind: output, shape index: {}]
  %s19 = sld [smem:[#allocation0]]
  $region121: #{tpu_custom_call.1} parent=0
    _
  %s21 = ssub.s32 1, %s19
  %s22 = scalar_select 0, %s21, %s19
  $region1: #{tpu_custom_call.1} parent=0
    #allocation2 [shape = 'u8[8192]{0}', space=vmem, size = 0x2000, scoped, tag = 'input window, operand 0']
    #allocation3 [shape = 's32[2]{0}', space=sflag, size = 0x8, scoped, tag = 'scoped memory for tpu_custom_call.1']
    #allocation4 [shape = 's32[2]{0}', space=sflag, size = 0x8, scoped, tag = 'scoped memory for tpu_custom_call.1']
    #allocation5 [shape = 'u8[8192]{0}', space=vmem, size = 0x2000, scoped, tag = 'input window, operand 1']
    #allocation6 [shape = 's32[2]{0}', space=sflag, size = 0x8, scoped, tag = 'scoped memory for tpu_custom_call.1']
    #allocation7 [shape = 'u8[512]{0}', space=vmem, size = 0x400, scoped, tag = 'input window, operand 7, single buffered']
    #allocation8 [shape = 'u8[16384]{0}', space=vmem, size = 0x4000, scoped, tag = 'input window, operand 16, single buffered']
    #allocation9 [shape = 's32[1]{0}', space=sflag, size = 0x4, scoped, tag = 'scoped memory for tpu_custom_call.1']
    #allocation10 [shape = 'u8[32768]{0}', space=vmem, size = 0x8000, scoped, tag = 'output window, operand 0']
    %23 = vsyncpa [#allocation3], 0
    %s24 = scalar_lea.sflag [#allocation3], 1
    %25 = vsyncpa %s24, 0
    %26 = vsyncpa [#allocation6], 0
    %s27 = scalar_lea.sflag [#allocation6], 1
    %28 = vsyncpa %s27, 0
    %29 = vsyncpa [#allocation9], 0
    %30 = vsyncpa [#allocation4], 0
    %s31 = scalar_lea.sflag [#allocation4], 1
    %32 = vsyncpa %s31, 0
    loop: start=0, step=1, limit=5
    $region2: #{tpu_custom_call.1} parent=1 // loop_pre_header
      _
    $region3: #{tpu_custom_call.1} parent=1 // loop_header
      %s34 = sphi 0, %s38
      %p35 = scmp.ge.s32.totalorder %s34, 5
      %s44 = sphi 0, %s46
      %s47 = sphi 0, %s44
      %s48 = sphi 0, %s47
      %s64 = sphi 0, %s48
      %s70 = sphi 0, %s72
      %s73 = sphi 0, %s70
      %s74 = sphi 0, %s73
      %s90 = sphi 0, %s74
      %s94 = sphi 0, %s94
      %s96 = sphi 0, %s94
      %s97 = sphi 0, %s96
      %s111 = sphi 0, %s97
      %s115 = sphi 0, %s115
      %s117 = sphi 0, %s115
      %s118 = sphi 0, %s117
      %s132 = sphi 0, %s118
      %s136 = sphi 0, %s136
      %s138 = sphi 0, %s136
      %s139 = sphi 0, %s138
      %s153 = sphi 0, %s139
      %s157 = sphi 0, %s157
      %s159 = sphi 0, %s157
      %s160 = sphi 0, %s159
      %s174 = sphi 0, %s160
      %s178 = sphi 0, %s178
      %s180 = sphi 0, %s178
      %s181 = sphi 0, %s180
      %s195 = sphi 0, %s181
      %s199 = sphi 0, %s199
      %s201 = sphi 0, %s199
      %s202 = sphi 0, %s201
      %s216 = sphi 0, %s202
      %s220 = sphi 0, %s220
      %s222 = sphi 0, %s220
      %s223 = sphi 0, %s222
      %s237 = sphi 0, %s223
      %s241 = sphi 0, %s241
      %s243 = sphi 0, %s241
      %s244 = sphi 0, %s243
      %s258 = sphi 0, %s244
      %s262 = sphi 0, %s262
      %s264 = sphi 0, %s262
      %s265 = sphi 0, %s264
      %s279 = sphi 0, %s265
      %s283 = sphi 0, %s283
      %s285 = sphi 0, %s283
      %s286 = sphi 0, %s285
      %s300 = sphi 0, %s286
      %s304 = sphi 0, %s304
      %s306 = sphi 0, %s304
      %s307 = sphi 0, %s306
      %s321 = sphi 0, %s307
      %s325 = sphi 0, %s325
      %s327 = sphi 0, %s325
      %s328 = sphi 0, %s327
      %s342 = sphi 0, %s328
      %s346 = sphi 0, %s346
      %s348 = sphi 0, %s346
      %s349 = sphi 0, %s348
      %s363 = sphi 0, %s349
      %s367 = sphi 0, %s367
      %s369 = sphi 0, %s367
      %s370 = sphi 0, %s369
      %s384 = sphi 0, %s370
      %s388 = sphi 0, %s388
      %s390 = sphi 0, %s388
      %s391 = sphi 0, %s390
      %s405 = sphi 0, %s391
      %s409 = sphi 0, %s409
      %s411 = sphi 0, %s409
      %s412 = sphi 0, %s411
      %s426 = sphi 0, %s412
      %s432 = sphi 0, %s434
      %s435 = sphi 0, %s432
      %s436 = sphi 0, %s435
      %s452 = sphi 0, %s436
    $region4: #{tpu_custom_call.1} parent=1 // loop_header_branch
      %37 = sbr.rel (%p35) target = $region8
    $region5: #{tpu_custom_call.1} parent=1 // loop_body
      %s39 = ssub.s32 %s34, 1
      %s40 = ssub.s32 %s34, 2
      %s41 = sadd.s32 %s34, 1
      %s42 = ssub.s32 %s34, %s41
      %p43 = scmp.eq.s32.totalorder %s42, 0
      %s45 = sadd.s32 %s44, 1
      %s46 = scalar_select %p43, %s44, %s45
      %p49 = pneg %p43
      %p50 = scmp.eq.s32.totalorder %s34, 2
      %p51 = por %p49, %p50
      %p52 = scmp.ne.s32.totalorder %s44, %s47
      %p53 = scmp.eq.s32.totalorder %s34, 0
      %p54 = por %p52, %p53
      %p55 = scmp.ne.s32.totalorder %s44, %s47
      %p56 = scmp.eq.s32.totalorder %s39, 2
      %p57 = por %p55, %p56
      %p58 = scmp.ne.s32.totalorder %s47, %s48
      %p59 = scmp.eq.s32.totalorder %s39, 0
      %p60 = por %p58, %p59
      %p61 = scmp.ne.s32.totalorder %s47, %s48
      %p62 = scmp.eq.s32.totalorder %s40, 2
      %p63 = por %p61, %p62
      %p65 = scmp.ne.s32.totalorder %s48, %s64
      %p66 = scmp.eq.s32.totalorder %s40, 0
      %p67 = por %p65, %p66
      %s68 = ssub.s32 %s34, %s41
      %p69 = scmp.eq.s32.totalorder %s68, 0
      %s71 = sadd.s32 %s70, 1
      %s72 = scalar_select %p69, %s70, %s71
      %p75 = pneg %p69
      %p76 = scmp.eq.s32.totalorder %s34, 2
      %p77 = por %p75, %p76
      %p78 = scmp.ne.s32.totalorder %s70, %s73
      %p79 = scmp.eq.s32.totalorder %s34, 0
      %p80 = por %p78, %p79
      %p81 = scmp.ne.s32.totalorder %s70, %s73
      %p82 = scmp.eq.s32.totalorder %s39, 2
      %p83 = por %p81, %p82
      %p84 = scmp.ne.s32.totalorder %s73, %s74
      %p85 = scmp.eq.s32.totalorder %s39, 0
      %p86 = por %p84, %p85
      %p87 = scmp.ne.s32.totalorder %s73, %s74
      %p88 = scmp.eq.s32.totalorder %s40, 2
      %p89 = por %p87, %p88
      %p91 = scmp.ne.s32.totalorder %s74, %s90
      %p92 = scmp.eq.s32.totalorder %s40, 0
      %p93 = por %p91, %p92
      %s95 = sadd.s32 %s94, 1
      %p98 = scmp.eq.s32.totalorder %s34, 2
      %p99 = scmp.ne.s32.totalorder %s94, %s96
      %p100 = scmp.eq.s32.totalorder %s34, 0
      %p101 = por %p99, %p100
      %p102 = scmp.ne.s32.totalorder %s94, %s96
      %p103 = scmp.eq.s32.totalorder %s39, 2
      %p104 = por %p102, %p103
      %p105 = scmp.ne.s32.totalorder %s96, %s97
      %p106 = scmp.eq.s32.totalorder %s39, 0
      %p107 = por %p105, %p106
      %p108 = scmp.ne.s32.totalorder %s96, %s97
      %p109 = scmp.eq.s32.totalorder %s40, 2
      %p110 = por %p108, %p109
      %p112 = scmp.ne.s32.totalorder %s97, %s111
      %p113 = scmp.eq.s32.totalorder %s40, 0
      %p114 = por %p112, %p113
      %s116 = sadd.s32 %s115, 1
      %p119 = scmp.eq.s32.totalorder %s34, 2
      %p120 = scmp.ne.s32.totalorder %s115, %s117
      %p121 = scmp.eq.s32.totalorder %s34, 0
      %p122 = por %p120, %p121
      %p123 = scmp.ne.s32.totalorder %s115, %s117
      %p124 = scmp.eq.s32.totalorder %s39, 2
      %p125 = por %p123, %p124
      %p126 = scmp.ne.s32.totalorder %s117, %s118
      %p127 = scmp.eq.s32.totalorder %s39, 0
      %p128 = por %p126, %p127
      %p129 = scmp.ne.s32.totalorder %s117, %s118
      %p130 = scmp.eq.s32.totalorder %s40, 2
      %p131 = por %p129, %p130
      %p133 = scmp.ne.s32.totalorder %s118, %s132
      %p134 = scmp.eq.s32.totalorder %s40, 0
      %p135 = por %p133, %p134
      %s137 = sadd.s32 %s136, 1
      %p140 = scmp.eq.s32.totalorder %s34, 2
      %p141 = scmp.ne.s32.totalorder %s136, %s138
      %p142 = scmp.eq.s32.totalorder %s34, 0
      %p143 = por %p141, %p142
      %p144 = scmp.ne.s32.totalorder %s136, %s138
      %p145 = scmp.eq.s32.totalorder %s39, 2
      %p146 = por %p144, %p145
      %p147 = scmp.ne.s32.totalorder %s138, %s139
      %p148 = scmp.eq.s32.totalorder %s39, 0
      %p149 = por %p147, %p148
      %p150 = scmp.ne.s32.totalorder %s138, %s139
      %p151 = scmp.eq.s32.totalorder %s40, 2
      %p152 = por %p150, %p151
      %p154 = scmp.ne.s32.totalorder %s139, %s153
      %p155 = scmp.eq.s32.totalorder %s40, 0
      %p156 = por %p154, %p155
      %s158 = sadd.s32 %s157, 1
      %p161 = scmp.eq.s32.totalorder %s34, 2
      %p162 = scmp.ne.s32.totalorder %s157, %s159
      %p163 = scmp.eq.s32.totalorder %s34, 0
      %p164 = por %p162, %p163
      %p165 = scmp.ne.s32.totalorder %s157, %s159
      %p166 = scmp.eq.s32.totalorder %s39, 2
      %p167 = por %p165, %p166
      %p168 = scmp.ne.s32.totalorder %s159, %s160
      %p169 = scmp.eq.s32.totalorder %s39, 0
      %p170 = por %p168, %p169
      %p171 = scmp.ne.s32.totalorder %s159, %s160
      %p172 = scmp.eq.s32.totalorder %s40, 2
      %p173 = por %p171, %p172
      %p175 = scmp.ne.s32.totalorder %s160, %s174
      %p176 = scmp.eq.s32.totalorder %s40, 0
      %p177 = por %p175, %p176
      %s179 = sadd.s32 %s178, 1
      %p182 = scmp.eq.s32.totalorder %s34, 2
      %p183 = scmp.ne.s32.totalorder %s178, %s180
      %p184 = scmp.eq.s32.totalorder %s34, 0
      %p185 = por %p183, %p184
      %p186 = scmp.ne.s32.totalorder %s178, %s180
      %p187 = scmp.eq.s32.totalorder %s39, 2
      %p188 = por %p186, %p187
      %p189 = scmp.ne.s32.totalorder %s180, %s181
      %p190 = scmp.eq.s32.totalorder %s39, 0
      %p191 = por %p189, %p190
      %p192 = scmp.ne.s32.totalorder %s180, %s181
      %p193 = scmp.eq.s32.totalorder %s40, 2
      %p194 = por %p192, %p193
      %p196 = scmp.ne.s32.totalorder %s181, %s195
      %p197 = scmp.eq.s32.totalorder %s40, 0
      %p198 = por %p196, %p197
      %s200 = sadd.s32 %s199, 1
      %p203 = scmp.eq.s32.totalorder %s34, 2
      %p204 = scmp.ne.s32.totalorder %s199, %s201
      %p205 = scmp.eq.s32.totalorder %s34, 0
      %p206 = por %p204, %p205
      %p207 = scmp.ne.s32.totalorder %s199, %s201
      %p208 = scmp.eq.s32.totalorder %s39, 2
      %p209 = por %p207, %p208
      %p210 = scmp.ne.s32.totalorder %s201, %s202
      %p211 = scmp.eq.s32.totalorder %s39, 0
      %p212 = por %p210, %p211
      %p213 = scmp.ne.s32.totalorder %s201, %s202
      %p214 = scmp.eq.s32.totalorder %s40, 2
      %p215 = por %p213, %p214
      %p217 = scmp.ne.s32.totalorder %s202, %s216
      %p218 = scmp.eq.s32.totalorder %s40, 0
      %p219 = por %p217, %p218
      %s221 = sadd.s32 %s220, 1
      %p224 = scmp.eq.s32.totalorder %s34, 2
      %p225 = scmp.ne.s32.totalorder %s220, %s222
      %p226 = scmp.eq.s32.totalorder %s34, 0
      %p227 = por %p225, %p226
      %p228 = scmp.ne.s32.totalorder %s220, %s222
      %p229 = scmp.eq.s32.totalorder %s39, 2
      %p230 = por %p228, %p229
      %p231 = scmp.ne.s32.totalorder %s222, %s223
      %p232 = scmp.eq.s32.totalorder %s39, 0
      %p233 = por %p231, %p232
      %p234 = scmp.ne.s32.totalorder %s222, %s223
      %p235 = scmp.eq.s32.totalorder %s40, 2
      %p236 = por %p234, %p235
      %p238 = scmp.ne.s32.totalorder %s223, %s237
      %p239 = scmp.eq.s32.totalorder %s40, 0
      %p240 = por %p238, %p239
      %s242 = sadd.s32 %s241, 1
      %p245 = scmp.eq.s32.totalorder %s34, 2
      %p246 = scmp.ne.s32.totalorder %s241, %s243
      %p247 = scmp.eq.s32.totalorder %s34, 0
      %p248 = por %p246, %p247
      %p249 = scmp.ne.s32.totalorder %s241, %s243
      %p250 = scmp.eq.s32.totalorder %s39, 2
      %p251 = por %p249, %p250
      %p252 = scmp.ne.s32.totalorder %s243, %s244
      %p253 = scmp.eq.s32.totalorder %s39, 0
      %p254 = por %p252, %p253
      %p255 = scmp.ne.s32.totalorder %s243, %s244
      %p256 = scmp.eq.s32.totalorder %s40, 2
      %p257 = por %p255, %p256
      %p259 = scmp.ne.s32.totalorder %s244, %s258
      %p260 = scmp.eq.s32.totalorder %s40, 0
      %p261 = por %p259, %p260
      %s263 = sadd.s32 %s262, 1
      %p266 = scmp.eq.s32.totalorder %s34, 2
      %p267 = scmp.ne.s32.totalorder %s262, %s264
      %p268 = scmp.eq.s32.totalorder %s34, 0
      %p269 = por %p267, %p268
      %p270 = scmp.ne.s32.totalorder %s262, %s264
      %p271 = scmp.eq.s32.totalorder %s39, 2
      %p272 = por %p270, %p271
      %p273 = scmp.ne.s32.totalorder %s264, %s265
      %p274 = scmp.eq.s32.totalorder %s39, 0
      %p275 = por %p273, %p274
      %p276 = scmp.ne.s32.totalorder %s264, %s265
      %p277 = scmp.eq.s32.totalorder %s40, 2
      %p278 = por %p276, %p277
      %p280 = scmp.ne.s32.totalorder %s265, %s279
      %p281 = scmp.eq.s32.totalorder %s40, 0
      %p282 = por %p280, %p281
      %s284 = sadd.s32 %s283, 1
      %p287 = scmp.eq.s32.totalorder %s34, 2
      %p288 = scmp.ne.s32.totalorder %s283, %s285
      %p289 = scmp.eq.s32.totalorder %s34, 0
      %p290 = por %p288, %p289
      %p291 = scmp.ne.s32.totalorder %s283, %s285
      %p292 = scmp.eq.s32.totalorder %s39, 2
      %p293 = por %p291, %p292
      %p294 = scmp.ne.s32.totalorder %s285, %s286
      %p295 = scmp.eq.s32.totalorder %s39, 0
      %p296 = por %p294, %p295
      %p297 = scmp.ne.s32.totalorder %s285, %s286
      %p298 = scmp.eq.s32.totalorder %s40, 2
      %p299 = por %p297, %p298
      %p301 = scmp.ne.s32.totalorder %s286, %s300
      %p302 = scmp.eq.s32.totalorder %s40, 0
      %p303 = por %p301, %p302
      %s305 = sadd.s32 %s304, 1
      %p308 = scmp.eq.s32.totalorder %s34, 2
      %p309 = scmp.ne.s32.totalorder %s304, %s306
      %p310 = scmp.eq.s32.totalorder %s34, 0
      %p311 = por %p309, %p310
      %p312 = scmp.ne.s32.totalorder %s304, %s306
      %p313 = scmp.eq.s32.totalorder %s39, 2
      %p314 = por %p312, %p313
      %p315 = scmp.ne.s32.totalorder %s306, %s307
      %p316 = scmp.eq.s32.totalorder %s39, 0
      %p317 = por %p315, %p316
      %p318 = scmp.ne.s32.totalorder %s306, %s307
      %p319 = scmp.eq.s32.totalorder %s40, 2
      %p320 = por %p318, %p319
      %p322 = scmp.ne.s32.totalorder %s307, %s321
      %p323 = scmp.eq.s32.totalorder %s40, 0
      %p324 = por %p322, %p323
      %s326 = sadd.s32 %s325, 1
      %p329 = scmp.eq.s32.totalorder %s34, 2
      %p330 = scmp.ne.s32.totalorder %s325, %s327
      %p331 = scmp.eq.s32.totalorder %s34, 0
      %p332 = por %p330, %p331
      %p333 = scmp.ne.s32.totalorder %s325, %s327
      %p334 = scmp.eq.s32.totalorder %s39, 2
      %p335 = por %p333, %p334
      %p336 = scmp.ne.s32.totalorder %s327, %s328
      %p337 = scmp.eq.s32.totalorder %s39, 0
      %p338 = por %p336, %p337
      %p339 = scmp.ne.s32.totalorder %s327, %s328
      %p340 = scmp.eq.s32.totalorder %s40, 2
      %p341 = por %p339, %p340
      %p343 = scmp.ne.s32.totalorder %s328, %s342
      %p344 = scmp.eq.s32.totalorder %s40, 0
      %p345 = por %p343, %p344
      %s347 = sadd.s32 %s346, 1
      %p350 = scmp.eq.s32.totalorder %s34, 2
      %p351 = scmp.ne.s32.totalorder %s346, %s348
      %p352 = scmp.eq.s32.totalorder %s34, 0
      %p353 = por %p351, %p352
      %p354 = scmp.ne.s32.totalorder %s346, %s348
      %p355 = scmp.eq.s32.totalorder %s39, 2
      %p356 = por %p354, %p355
      %p357 = scmp.ne.s32.totalorder %s348, %s349
      %p358 = scmp.eq.s32.totalorder %s39, 0
      %p359 = por %p357, %p358
      %p360 = scmp.ne.s32.totalorder %s348, %s349
      %p361 = scmp.eq.s32.totalorder %s40, 2
      %p362 = por %p360, %p361
      %p364 = scmp.ne.s32.totalorder %s349, %s363
      %p365 = scmp.eq.s32.totalorder %s40, 0
      %p366 = por %p364, %p365
      %s368 = sadd.s32 %s367, 1
      %p371 = scmp.eq.s32.totalorder %s34, 2
      %p372 = scmp.ne.s32.totalorder %s367, %s369
      %p373 = scmp.eq.s32.totalorder %s34, 0
      %p374 = por %p372, %p373
      %p375 = scmp.ne.s32.totalorder %s367, %s369
      %p376 = scmp.eq.s32.totalorder %s39, 2
      %p377 = por %p375, %p376
      %p378 = scmp.ne.s32.totalorder %s369, %s370
      %p379 = scmp.eq.s32.totalorder %s39, 0
      %p380 = por %p378, %p379
      %p381 = scmp.ne.s32.totalorder %s369, %s370
      %p382 = scmp.eq.s32.totalorder %s40, 2
      %p383 = por %p381, %p382
      %p385 = scmp.ne.s32.totalorder %s370, %s384
      %p386 = scmp.eq.s32.totalorder %s40, 0
      %p387 = por %p385, %p386
      %s389 = sadd.s32 %s388, 1
      %p392 = scmp.eq.s32.totalorder %s34, 2
      %p393 = scmp.ne.s32.totalorder %s388, %s390
      %p394 = scmp.eq.s32.totalorder %s34, 0
      %p395 = por %p393, %p394
      %p396 = scmp.ne.s32.totalorder %s388, %s390
      %p397 = scmp.eq.s32.totalorder %s39, 2
      %p398 = por %p396, %p397
      %p399 = scmp.ne.s32.totalorder %s390, %s391
      %p400 = scmp.eq.s32.totalorder %s39, 0
      %p401 = por %p399, %p400
      %p402 = scmp.ne.s32.totalorder %s390, %s391
      %p403 = scmp.eq.s32.totalorder %s40, 2
      %p404 = por %p402, %p403
      %p406 = scmp.ne.s32.totalorder %s391, %s405
      %p407 = scmp.eq.s32.totalorder %s40, 0
      %p408 = por %p406, %p407
      %s410 = sadd.s32 %s409, 1
      %p413 = scmp.eq.s32.totalorder %s34, 2
      %p414 = scmp.ne.s32.totalorder %s409, %s411
      %p415 = scmp.eq.s32.totalorder %s34, 0
      %p416 = por %p414, %p415
      %p417 = scmp.ne.s32.totalorder %s409, %s411
      %p418 = scmp.eq.s32.totalorder %s39, 2
      %p419 = por %p417, %p418
      %p420 = scmp.ne.s32.totalorder %s411, %s412
      %p421 = scmp.eq.s32.totalorder %s39, 0
      %p422 = por %p420, %p421
      %p423 = scmp.ne.s32.totalorder %s411, %s412
      %p424 = scmp.eq.s32.totalorder %s40, 2
      %p425 = por %p423, %p424
      %p427 = scmp.ne.s32.totalorder %s412, %s426
      %p428 = scmp.eq.s32.totalorder %s40, 0
      %p429 = por %p427, %p428
      %s430 = ssub.s32 %s34, %s41
      %p431 = scmp.eq.s32.totalorder %s430, 0
      %s433 = sadd.s32 %s432, 1
      %s434 = scalar_select %p431, %s432, %s433
      %p437 = pneg %p431
      %p438 = scmp.eq.s32.totalorder %s34, 2
      %p439 = por %p437, %p438
      %p440 = scmp.ne.s32.totalorder %s432, %s435
      %p441 = scmp.eq.s32.totalorder %s34, 0
      %p442 = por %p440, %p441
      %p443 = scmp.ne.s32.totalorder %s432, %s435
      %p444 = scmp.eq.s32.totalorder %s39, 2
      %p445 = por %p443, %p444
      %p446 = scmp.ne.s32.totalorder %s435, %s436
      %p447 = scmp.eq.s32.totalorder %s39, 0
      %p448 = por %p446, %p447
      %p449 = scmp.ne.s32.totalorder %s435, %s436
      %p450 = scmp.eq.s32.totalorder %s40, 2
      %p451 = por %p449, %p450
      %p453 = scmp.ne.s32.totalorder %s436, %s452
      %p454 = scmp.eq.s32.totalorder %s40, 0
      %p455 = por %p453, %p454
      %p456 = scmp.le.s32.totalorder 1, %s34
      %p457 = scmp.lt.s32.totalorder %s34, 4
      %p458 = pnand %p456, %p457
      %p459 = pneg %p458
      // Predicated region
      $region9: #{tpu_custom_call.1} parent=5 // pred_check
        _
      $region10: #{tpu_custom_call.1} parent=5 // pred_check_branch
        %461 = sbr.rel (%p458) target = $region12
      $region11: #{tpu_custom_call.1} parent=5 // pred_region
        %s462 = ssub.s32 %s34, 1
        // Predicated region
        $region13: #{tpu_custom_call.1} parent=11 // pred_check
          %p463 = pneg %p107
        $region14: #{tpu_custom_call.1} parent=11 // pred_check_branch
          %465 = sbr.rel (%p463) target = $region16
        $region15: #{tpu_custom_call.1} parent=11 // pred_region
          _
        $region16: #{tpu_custom_call.1} parent=11 // pred_fallthru
          _
        // Predicated region
        $region17: #{tpu_custom_call.1} parent=11 // pred_check
          %p466 = pneg %p128
        $region18: #{tpu_custom_call.1} parent=11 // pred_check_branch
          %468 = sbr.rel (%p466) target = $region20
        $region19: #{tpu_custom_call.1} parent=11 // pred_region
          _
        $region20: #{tpu_custom_call.1} parent=11 // pred_fallthru
          _
        // Predicated region
        $region21: #{tpu_custom_call.1} parent=11 // pred_check
          %p469 = pneg %p149
        $region22: #{tpu_custom_call.1} parent=11 // pred_check_branch
          %471 = sbr.rel (%p469) target = $region24
        $region23: #{tpu_custom_call.1} parent=11 // pred_region
          _
        $region24: #{tpu_custom_call.1} parent=11 // pred_fallthru
          _
        // Predicated region
        $region25: #{tpu_custom_call.1} parent=11 // pred_check
          %p472 = pneg %p170
        $region26: #{tpu_custom_call.1} parent=11 // pred_check_branch
          %474 = sbr.rel (%p472) target = $region28
        $region27: #{tpu_custom_call.1} parent=11 // pred_region
          _
        $region28: #{tpu_custom_call.1} parent=11 // pred_fallthru
          _
        // Predicated region
        $region29: #{tpu_custom_call.1} parent=11 // pred_check
          %p475 = pneg %p191
        $region30: #{tpu_custom_call.1} parent=11 // pred_check_branch
          %477 = sbr.rel (%p475) target = $region32
        $region31: #{tpu_custom_call.1} parent=11 // pred_region
          _
        $region32: #{tpu_custom_call.1} parent=11 // pred_fallthru
          _
        // Predicated region
        $region33: #{tpu_custom_call.1} parent=11 // pred_check
          %p478 = pneg %p212
        $region34: #{tpu_custom_call.1} parent=11 // pred_check_branch
          %480 = sbr.rel (%p478) target = $region36
        $region35: #{tpu_custom_call.1} parent=11 // pred_region
          %s482 = ssub.s32 16, 16
          %483 = vsyncadd [#allocation6], %s482
          %s485 = sshll.u32 [#allocation7], 4
          %s486 = int_to_ptr.vmem [resolvable:$true] %s485
          %488 = dma.hbm_to_vmem [thread:$0]  %s7, 16, %s486, [#allocation6]
        $region36: #{tpu_custom_call.1} parent=11 // pred_fallthru
          _
        // Predicated region
        $region37: #{tpu_custom_call.1} parent=11 // pred_check
          %p489 = pneg %p233
        $region38: #{tpu_custom_call.1} parent=11 // pred_check_branch
          %491 = sbr.rel (%p489) target = $region40
        $region39: #{tpu_custom_call.1} parent=11 // pred_region
          _
        $region40: #{tpu_custom_call.1} parent=11 // pred_fallthru
          _
        // Predicated region
        $region41: #{tpu_custom_call.1} parent=11 // pred_check
          %p492 = pneg %p254
        $region42: #{tpu_custom_call.1} parent=11 // pred_check_branch
          %494 = sbr.rel (%p492) target = $region44
        $region43: #{tpu_custom_call.1} parent=11 // pred_region
          _
        $region44: #{tpu_custom_call.1} parent=11 // pred_fallthru
          _
        // Predicated region
        $region45: #{tpu_custom_call.1} parent=11 // pred_check
          %p495 = pneg %p275
        $region46: #{tpu_custom_call.1} parent=11 // pred_check_branch
          %497 = sbr.rel (%p495) target = $region48
        $region47: #{tpu_custom_call.1} parent=11 // pred_region
          _
        $region48: #{tpu_custom_call.1} parent=11 // pred_fallthru
          _
        // Predicated region
        $region49: #{tpu_custom_call.1} parent=11 // pred_check
          %p498 = pneg %p296
        $region50: #{tpu_custom_call.1} parent=11 // pred_check_branch
          %500 = sbr.rel (%p498) target = $region52
        $region51: #{tpu_custom_call.1} parent=11 // pred_region
          _
        $region52: #{tpu_custom_call.1} parent=11 // pred_fallthru
          _
        // Predicated region
        $region53: #{tpu_custom_call.1} parent=11 // pred_check
          %p501 = pneg %p317
        $region54: #{tpu_custom_call.1} parent=11 // pred_check_branch
          %503 = sbr.rel (%p501) target = $region56
        $region55: #{tpu_custom_call.1} parent=11 // pred_region
          _
        $region56: #{tpu_custom_call.1} parent=11 // pred_fallthru
          _
        // Predicated region
        $region57: #{tpu_custom_call.1} parent=11 // pred_check
          %p504 = pneg %p338
        $region58: #{tpu_custom_call.1} parent=11 // pred_check_branch
          %506 = sbr.rel (%p504) target = $region60
        $region59: #{tpu_custom_call.1} parent=11 // pred_region
          _
        $region60: #{tpu_custom_call.1} parent=11 // pred_fallthru
          _
        // Predicated region
        $region61: #{tpu_custom_call.1} parent=11 // pred_check
          %p507 = pneg %p359
        $region62: #{tpu_custom_call.1} parent=11 // pred_check_branch
          %509 = sbr.rel (%p507) target = $region64
        $region63: #{tpu_custom_call.1} parent=11 // pred_region
          _
        $region64: #{tpu_custom_call.1} parent=11 // pred_fallthru
          _
        // Predicated region
        $region65: #{tpu_custom_call.1} parent=11 // pred_check
          %p510 = pneg %p380
        $region66: #{tpu_custom_call.1} parent=11 // pred_check_branch
          %512 = sbr.rel (%p510) target = $region68
        $region67: #{tpu_custom_call.1} parent=11 // pred_region
          _
        $region68: #{tpu_custom_call.1} parent=11 // pred_fallthru
          _
        // Predicated region
        $region69: #{tpu_custom_call.1} parent=11 // pred_check
          %p513 = pneg %p401
        $region70: #{tpu_custom_call.1} parent=11 // pred_check_branch
          %515 = sbr.rel (%p513) target = $region72
        $region71: #{tpu_custom_call.1} parent=11 // pred_region
          %s517 = ssub.s32 512, 512
          %518 = vsyncadd [#allocation9], %s517
          %s519 = sshll.u32 [#allocation8], 4
          %s520 = int_to_ptr.vmem [resolvable:$true] %s519
          %525 = dma.hbm_to_vmem [thread:$0]  %s16, 512, %s520, [#allocation9], 128, 128, 8
        $region72: #{tpu_custom_call.1} parent=11 // pred_fallthru
          _
        // Predicated region
        $region73: #{tpu_custom_call.1} parent=11 // pred_check
          %p526 = pneg %p422
        $region74: #{tpu_custom_call.1} parent=11 // pred_check_branch
          %528 = sbr.rel (%p526) target = $region76
        $region75: #{tpu_custom_call.1} parent=11 // pred_region
          _
        $region76: #{tpu_custom_call.1} parent=11 // pred_fallthru
          _
      $region12: #{tpu_custom_call.1} parent=5 // pred_fallthru
        _
      %p529 = scmp.lt.s32.totalorder %s34, 3
      // Predicated region
      $region77: #{tpu_custom_call.1} parent=5 // pred_check
        %p530 = pneg %p529
      $region78: #{tpu_custom_call.1} parent=5 // pred_check_branch
        %532 = sbr.rel (%p530) target = $region80
      $region79: #{tpu_custom_call.1} parent=5 // pred_region
        // Predicated region
        $region81: #{tpu_custom_call.1} parent=79 // pred_check
          %p533 = pneg %p54
        $region82: #{tpu_custom_call.1} parent=79 // pred_check_branch
          %535 = sbr.rel (%p533) target = $region84
        $region83: #{tpu_custom_call.1} parent=79 // pred_region
          %s536 = sand.u32 %s44, 1
          %s537 = scalar_lea.sflag [#allocation3], %s536
          %s538 = sand.u32 %s44, 1
          %s539 = smul.addr %s538, 8
          %s540 = scalar_lea.vmem [#allocation2], %s539
          %s542 = ssub.s32 128, 128
          %543 = vsyncadd %s537, %s542
          %s544 = smul.addr %s34, 128
          %s545 = scalar_lea.hbm %s0, %s544
          %s547 = sshll.u32 %s540, 4
          %s548 = int_to_ptr.vmem [resolvable:$true] %s547
          %550 = dma.hbm_to_vmem [thread:$0]  %s545, 128, %s548, %s537
        $region84: #{tpu_custom_call.1} parent=79 // pred_fallthru
          _
        // Predicated region
        $region85: #{tpu_custom_call.1} parent=79 // pred_check
          %p551 = pneg %p80
        $region86: #{tpu_custom_call.1} parent=79 // pred_check_branch
          %553 = sbr.rel (%p551) target = $region88
        $region87: #{tpu_custom_call.1} parent=79 // pred_region
          %s554 = sand.u32 %s34, 1
          %s555 = scalar_lea.sflag [#allocation6], %s554
          %s556 = sand.u32 %s70, 1
          %s557 = smul.addr %s556, 8
          %s558 = scalar_lea.vmem [#allocation5], %s557
          %s560 = ssub.s32 128, 128
          %561 = vsyncadd %s555, %s560
          %s562 = smul.addr %s34, 128
          %s563 = scalar_lea.hbm %s1, %s562
          %s565 = sshll.u32 %s558, 4
          %s566 = int_to_ptr.vmem [resolvable:$true] %s565
          %568 = dma.hbm_to_vmem [thread:$0]  %s563, 128, %s566, %s555
        $region88: #{tpu_custom_call.1} parent=79 // pred_fallthru
          _
      $region80: #{tpu_custom_call.1} parent=5 // pred_fallthru
        _
      %p569 = scmp.le.s32.totalorder 1, %s34
      %p570 = scmp.lt.s32.totalorder %s34, 4
      %p571 = pnand %p569, %p570
      %p572 = pneg %p571
      // Predicated region
      $region89: #{tpu_custom_call.1} parent=5 // pred_check
        _
      $region90: #{tpu_custom_call.1} parent=5 // pred_check_branch
        %574 = sbr.rel (%p571) target = $region92
      $region91: #{tpu_custom_call.1} parent=5 // pred_region
        %s575 = ssub.s32 %s34, 1
        %s576 = sand.u32 %s47, 1
        %s577 = scalar_lea.sflag [#allocation3], %s576
        %s578 = sand.u32 %s47, 1
        %s579 = smul.addr %s578, 8
        %s580 = scalar_lea.vmem [#allocation2], %s579
        // Predicated region
        $region93: #{tpu_custom_call.1} parent=91 // pred_check
          %p581 = pneg %p60
        $region94: #{tpu_custom_call.1} parent=91 // pred_check_branch
          %583 = sbr.rel (%p581) target = $region96
        $region95: #{tpu_custom_call.1} parent=91 // pred_region
          %584 = dma.done %s577, 128
        $region96: #{tpu_custom_call.1} parent=91 // pred_fallthru
          _
        %s585 = sand.u32 %s39, 1
        %s586 = scalar_lea.sflag [#allocation6], %s585
        %s587 = sand.u32 %s73, 1
        %s588 = smul.addr %s587, 8
        %s589 = scalar_lea.vmem [#allocation5], %s588
        // Predicated region
        $region97: #{tpu_custom_call.1} parent=91 // pred_check
          %p590 = pneg %p86
        $region98: #{tpu_custom_call.1} parent=91 // pred_check_branch
          %592 = sbr.rel (%p590) target = $region100
        $region99: #{tpu_custom_call.1} parent=91 // pred_region
          %593 = dma.done %s586, 128
        $region100: #{tpu_custom_call.1} parent=91 // pred_fallthru
          _
        // Predicated region
        $region101: #{tpu_custom_call.1} parent=91 // pred_check
          %p594 = pneg %p212
        $region102: #{tpu_custom_call.1} parent=91 // pred_check_branch
          %596 = sbr.rel (%p594) target = $region104
        $region103: #{tpu_custom_call.1} parent=91 // pred_region
          %597 = dma.done [#allocation6], 16
        $region104: #{tpu_custom_call.1} parent=91 // pred_fallthru
          _
        // Predicated region
        $region105: #{tpu_custom_call.1} parent=91 // pred_check
          %p598 = pneg %p401
        $region106: #{tpu_custom_call.1} parent=91 // pred_check_branch
          %600 = sbr.rel (%p598) target = $region108
        $region107: #{tpu_custom_call.1} parent=91 // pred_region
          %601 = dma.done [#allocation9], 512
        $region108: #{tpu_custom_call.1} parent=91 // pred_fallthru
          _
        %s602 = sand.u32 %s47, 1
        %s603 = scalar_lea.sflag [#allocation3], %s602
        %s604 = sand.u32 %s47, 1
        %s605 = smul.addr %s604, 8
        %s606 = scalar_lea.vmem [#allocation2], %s605
        %p607 = pneg %p60
        %p608 = pneg %p57
        %s609 = sand.u32 %s39, 1
        %s610 = scalar_lea.sflag [#allocation6], %s609
        %s611 = sand.u32 %s73, 1
        %s612 = smul.addr %s611, 8
        %s613 = scalar_lea.vmem [#allocation5], %s612
        %p614 = pneg %p86
        %p615 = pneg %p83
        %p616 = pneg %p107
        %p617 = pneg %p104
        %p618 = pneg %p128
        %p619 = pneg %p125
        %p620 = pneg %p149
        %p621 = pneg %p146
        %p622 = pneg %p170
        %p623 = pneg %p167
        %p624 = pneg %p191
        %p625 = pneg %p188
        %p626 = pneg %p212
        %p627 = pneg %p209
        %p628 = pneg %p233
        %p629 = pneg %p230
        %p630 = pneg %p254
        %p631 = pneg %p251
        %p632 = pneg %p275
        %p633 = pneg %p272
        %p634 = pneg %p296
        %p635 = pneg %p293
        %p636 = pneg %p317
        %p637 = pneg %p314
        %p638 = pneg %p338
        %p639 = pneg %p335
        %p640 = pneg %p359
        %p641 = pneg %p356
        %p642 = pneg %p380
        %p643 = pneg %p377
        %p644 = pneg %p401
        %p645 = pneg %p398
        %p646 = pneg %p422
        %p647 = pneg %p419
        %p648 = pneg %p448
        %p649 = pneg %p445
        %s650 = sand.u32 %s435, 1
        %s651 = scalar_lea.sflag [#allocation4], %s650
        %s652 = sand.u32 %s435, 1
        %s653 = smul.addr %s652, 32
        %s654 = scalar_lea.vmem [#allocation10], %s653
        %v655 = vld [vmem:[%s580] sm:$0xff]
        %v656 = vld [vmem:[%s589] sm:$0xff]
        %v657 = vld [vmem:[%s2] sm:$0xff]
        %v658 = vld [vmem:[%s2 + $0x8] sm:$0xff]
        %v659 = vld [vmem:[%s2 + $0x10] sm:$0xff]
        %v660 = vld [vmem:[%s2 + $0x18] sm:$0xff]
        %v661 = vld [vmem:[%s3] sm:$0x1]
        %v663 = vlaneseq
        %v664 = vshrl.u32 %v663, 7
        %v665 = vsub.s32 0, %v664
        %v666 = vrot.slane %v661, %v665
        %vm668 = vcmask 261120
        %v670 = vsel %vm668, %v655, 0
        %672 = vmatprep.subr.mxu0 0.0
        %673 = vmatpush1.msra.mxu0 %v657
        %674 = vmatprep.subr.mxu0 0.0
        %675 = vmatpush1.msra.mxu0 %v658
        %676 = vmatprep.subr.mxu0 0.0
        %677 = vmatpush1.msra.mxu0 %v659
        %678 = vmatprep.subr.mxu0 0.0
        %679 = vmatpush1.msra.mxu0 %v660
        %680 = vmatprep.subr.mxu0 0.0
        %681 = vmatpush1.msra.mxu0 0.0
        %682 = vmatprep.subr.mxu0 0.0
        %683 = vmatpush1.msra.mxu0 0.0
        %684 = vmatprep.subr.mxu0 0.0
        %685 = vmatpush1.msra.mxu0 0.0
        %686 = vmatprep.subr.mxu0 0.0
        %687 = vmatpush1.msra.mxu0 0.0
        %688 = vmatprep.subr.mxu0 0.0
        %689 = vmatpush1.msra.mxu0 0.0
        %690 = vmatprep.subr.mxu0 0.0
        %691 = vmatpush1.msra.mxu0 0.0
        %692 = vmatprep.subr.mxu0 0.0
        %693 = vmatpush1.msra.mxu0 0.0
        %694 = vmatprep.subr.mxu0 0.0
        %695 = vmatpush1.msra.mxu0 0.0
        %696 = vmatprep.subr.mxu0 0.0
        %697 = vmatpush1.msra.mxu0 0.0
        %698 = vmatprep.subr.mxu0 0.0
        %699 = vmatpush1.msra.mxu0 0.0
        %700 = vmatprep.subr.mxu0 0.0
        %701 = vmatpush1.msra.mxu0 0.0
        %702 = vmatprep.subr.mxu0 0.0
        %703 = vmatpush1.msra.mxu0 0.0
        %704 = vmatprep.subr.mxu0 0.0
        %705 = vmatpush1.msra.mxu0 0.0
        %706 = vmatprep.subr.mxu0 0.0
        %707 = vmatpush1.msra.mxu0 0.0
        %708 = vmatprep.subr.mxu0 0.0
        %709 = vmatpush1.msra.mxu0 0.0
        %710 = vmatprep.subr.mxu0 0.0
        %711 = vmatpush1.msra.mxu0 0.0
        %712 = vmatprep.subr.mxu0 0.0
        %713 = vmatpush1.msra.mxu0 0.0
        %714 = vmatprep.subr.mxu0 0.0
        %715 = vmatpush1.msra.mxu0 0.0
        %716 = vmatprep.subr.mxu0 0.0
        %717 = vmatpush1.msra.mxu0 0.0
        %718 = vmatprep.subr.mxu0 0.0
        %719 = vmatpush1.msra.mxu0 0.0
        %720 = vmatprep.subr.mxu0 0.0
        %721 = vmatpush1.msra.mxu0 0.0
        %722 = vmatprep.subr.mxu0 0.0
        %723 = vmatpush1.msra.mxu0 0.0
        %724 = vmatprep.subr.mxu0 0.0
        %725 = vmatpush1.msra.mxu0 0.0
        %726 = vmatprep.subr.mxu0 0.0
        %727 = vmatpush1.msra.mxu0 0.0
        %728 = vmatprep.subr.mxu0 0.0
        %729 = vmatpush1.msra.mxu0 0.0
        %730 = vmatprep.subr.mxu0 0.0
        %731 = vmatpush1.msra.mxu0 0.0
        %732 = vmatprep.subr.mxu0 0.0
        %733 = vmatpush1.msra.mxu0 0.0
        %734 = vmatprep.subr.mxu0 0.0
        %735 = vmatpush1.msra.mxu0 0.0
        %736 = vmatprep.mubr.f32.mxu0 0.0
        %737 = vmatmul.mubr.f32.gmra.mrb[0].mxu0 %v670
        %v738 = vpop.f32.mrb[0].mxu0
        %v739 = vadd.f32 %v666, %v738
        %v740 = vpop.f32.mrb[0].mxu0
        %741 = vdwg.mxu0
        %v742 = vmax.f32 %v739, 0.0
        %v743 = vld [vmem:[%s4] sm:$0xff]
        %v744 = vld [vmem:[%s4 + $0x8] sm:$0xff]
        %v745 = vld [vmem:[%s4 + $0x10] sm:$0xff]
        %v746 = vld [vmem:[%s4 + $0x18] sm:$0xff]
        %v747 = vld [vmem:[%s5] sm:$0x1]
        %v749 = vlaneseq
        %v750 = vshrl.u32 %v749, 7
        %v751 = vsub.s32 0, %v750
        %v752 = vrot.slane %v747, %v751
        %v755 = vsel %vm668, %v742, 0
        %757 = vmatprep.subr.mxu0 0.0
        %758 = vmatpush1.msra.mxu0 %v743
        %759 = vmatprep.subr.mxu0 0.0
        %760 = vmatpush1.msra.mxu0 %v744
        %761 = vmatprep.subr.mxu0 0.0
        %762 = vmatpush1.msra.mxu0 %v745
        %763 = vmatprep.subr.mxu0 0.0
        %764 = vmatpush1.msra.mxu0 %v746
        %765 = vmatprep.subr.mxu0 0.0
        %766 = vmatpush1.msra.mxu0 0.0
        %767 = vmatprep.subr.mxu0 0.0
        %768 = vmatpush1.msra.mxu0 0.0
        %769 = vmatprep.subr.mxu0 0.0
        %770 = vmatpush1.msra.mxu0 0.0
        %771 = vmatprep.subr.mxu0 0.0
        %772 = vmatpush1.msra.mxu0 0.0
        %773 = vmatprep.subr.mxu0 0.0
        %774 = vmatpush1.msra.mxu0 0.0
        %775 = vmatprep.subr.mxu0 0.0
        %776 = vmatpush1.msra.mxu0 0.0
        %777 = vmatprep.subr.mxu0 0.0
        %778 = vmatpush1.msra.mxu0 0.0
        %779 = vmatprep.subr.mxu0 0.0
        %780 = vmatpush1.msra.mxu0 0.0
        %781 = vmatprep.subr.mxu0 0.0
        %782 = vmatpush1.msra.mxu0 0.0
        %783 = vmatprep.subr.mxu0 0.0
        %784 = vmatpush1.msra.mxu0 0.0
        %785 = vmatprep.subr.mxu0 0.0
        %786 = vmatpush1.msra.mxu0 0.0
        %787 = vmatprep.subr.mxu0 0.0
        %788 = vmatpush1.msra.mxu0 0.0
        %789 = vmatprep.subr.mxu0 0.0
        %790 = vmatpush1.msra.mxu0 0.0
        %791 = vmatprep.subr.mxu0 0.0
        %792 = vmatpush1.msra.mxu0 0.0
        %793 = vmatprep.subr.mxu0 0.0
        %794 = vmatpush1.msra.mxu0 0.0
        %795 = vmatprep.subr.mxu0 0.0
        %796 = vmatpush1.msra.mxu0 0.0
        %797 = vmatprep.subr.mxu0 0.0
        %798 = vmatpush1.msra.mxu0 0.0
        %799 = vmatprep.subr.mxu0 0.0
        %800 = vmatpush1.msra.mxu0 0.0
        %801 = vmatprep.subr.mxu0 0.0
        %802 = vmatpush1.msra.mxu0 0.0
        %803 = vmatprep.subr.mxu0 0.0
        %804 = vmatpush1.msra.mxu0 0.0
        %805 = vmatprep.subr.mxu0 0.0
        %806 = vmatpush1.msra.mxu0 0.0
        %807 = vmatprep.subr.mxu0 0.0
        %808 = vmatpush1.msra.mxu0 0.0
        %809 = vmatprep.subr.mxu0 0.0
        %810 = vmatpush1.msra.mxu0 0.0
        %811 = vmatprep.subr.mxu0 0.0
        %812 = vmatpush1.msra.mxu0 0.0
        %813 = vmatprep.subr.mxu0 0.0
        %814 = vmatpush1.msra.mxu0 0.0
        %815 = vmatprep.subr.mxu0 0.0
        %816 = vmatpush1.msra.mxu0 0.0
        %817 = vmatprep.subr.mxu0 0.0
        %818 = vmatpush1.msra.mxu0 0.0
        %819 = vmatprep.subr.mxu0 0.0
        %820 = vmatpush1.msra.mxu0 0.0
        %821 = vmatprep.mubr.f32.mxu0 0.0
        %822 = vmatmul.mubr.f32.gmra.mrb[0].mxu0 %v755
        %v823 = vpop.f32.mrb[0].mxu0
        %v824 = vadd.f32 %v752, %v823
        %v825 = vpop.f32.mrb[0].mxu0
        %826 = vdwg.mxu0
        %v827 = vld [vmem:[%s6] sm:$0x1]
        %v828 = vld [vmem:[#allocation7] sm:$0x1]
        %v829 = vsel %vm668, %v824, 0.0
        %830 = vadd.xlane.f32.xlu0 %v829
        %v831 = vpop.xlane.xlu0 %830
        %v832 = vrcp.pop 32.0
        %v833 = vmul.f32 %v831, %v832
        %v834 = vmul.f32 %v824, %v824
        %v835 = vsel %vm668, %v834, 0.0
        %836 = vadd.xlane.f32.xlu0 %v835
        %v837 = vpop.xlane.xlu0 %836
        %v838 = vmul.f32 %v837, %v832
        %v839 = vmul.f32 %v833, %v833
        %v840 = vsub.f32 %v838, %v839
        %v841 = vadd.f32 %v840, 1e-05
        %v842 = vrsqrt.pop %v841
        %v843 = vsub.f32 %v824, %v833
        %v844 = vmul.f32 %v843, %v842
        %v846 = vlaneseq
        %v847 = vshrl.u32 %v846, 7
        %v848 = vsub.s32 0, %v847
        %v849 = vrot.slane %v827, %v848
        %v851 = vmul.f32 %v844, %v849
        %v853 = vlaneseq
        %v854 = vshrl.u32 %v853, 7
        %v855 = vsub.s32 0, %v854
        %v856 = vrot.slane %v828, %v855
        %v858 = vadd.f32 %v851, %v856
        %v859 = vld [vmem:[%s8] sm:$0xff]
        %v860 = vld [vmem:[%s8 + $0x8] sm:$0xff]
        %v861 = vld [vmem:[%s8 + $0x10] sm:$0xff]
        %v862 = vld [vmem:[%s8 + $0x18] sm:$0xff]
        %v863 = vld [vmem:[%s8 + $0x20] sm:$0xff]
        %v864 = vld [vmem:[%s8 + $0x28] sm:$0xff]
        %v865 = vld [vmem:[%s8 + $0x30] sm:$0xff]
        %v866 = vld [vmem:[%s8 + $0x38] sm:$0xff]
        %v867 = vld [vmem:[%s9] sm:$0x3]
        %v869 = vlaneseq
        %v870 = vshrl.u32 %v869, 7
        %v871 = vsub.s32 0, %v870
        %v872 = vrot.slane %v867, %v871
        %v873 = vlaneseq
        %v874 = vshrl.u32 %v873, 7
        %v875 = vsub.s32 1, %v874
        %v876 = vrot.slane %v867, %v875
        %v880 = vsel %vm668, %v858, 0
        %882 = vmatprep.subr.mxu0 %v860
        %883 = vmatpush1.msra.mxu0 %v859
        %884 = vmatprep.subr.mxu0 %v862
        %885 = vmatpush1.msra.mxu0 %v861
        %886 = vmatprep.subr.mxu0 %v864
        %887 = vmatpush1.msra.mxu0 %v863
        %888 = vmatprep.subr.mxu0 %v866
        %889 = vmatpush1.msra.mxu0 %v865
        %890 = vmatprep.subr.mxu0 0.0
        %891 = vmatpush1.msra.mxu0 0.0
        %892 = vmatprep.subr.mxu0 0.0
        %893 = vmatpush1.msra.mxu0 0.0
        %894 = vmatprep.subr.mxu0 0.0
        %895 = vmatpush1.msra.mxu0 0.0
        %896 = vmatprep.subr.mxu0 0.0
        %897 = vmatpush1.msra.mxu0 0.0
        %898 = vmatprep.subr.mxu0 0.0
        %899 = vmatpush1.msra.mxu0 0.0
        %900 = vmatprep.subr.mxu0 0.0
        %901 = vmatpush1.msra.mxu0 0.0
        %902 = vmatprep.subr.mxu0 0.0
        %903 = vmatpush1.msra.mxu0 0.0
        %904 = vmatprep.subr.mxu0 0.0
        %905 = vmatpush1.msra.mxu0 0.0
        %906 = vmatprep.subr.mxu0 0.0
        %907 = vmatpush1.msra.mxu0 0.0
        %908 = vmatprep.subr.mxu0 0.0
        %909 = vmatpush1.msra.mxu0 0.0
        %910 = vmatprep.subr.mxu0 0.0
        %911 = vmatpush1.msra.mxu0 0.0
        %912 = vmatprep.subr.mxu0 0.0
        %913 = vmatpush1.msra.mxu0 0.0
        %914 = vmatprep.subr.mxu0 0.0
        %915 = vmatpush1.msra.mxu0 0.0
        %916 = vmatprep.subr.mxu0 0.0
        %917 = vmatpush1.msra.mxu0 0.0
        %918 = vmatprep.subr.mxu0 0.0
        %919 = vmatpush1.msra.mxu0 0.0
        %920 = vmatprep.subr.mxu0 0.0
        %921 = vmatpush1.msra.mxu0 0.0
        %922 = vmatprep.subr.mxu0 0.0
        %923 = vmatpush1.msra.mxu0 0.0
        %924 = vmatprep.subr.mxu0 0.0
        %925 = vmatpush1.msra.mxu0 0.0
        %926 = vmatprep.subr.mxu0 0.0
        %927 = vmatpush1.msra.mxu0 0.0
        %928 = vmatprep.subr.mxu0 0.0
        %929 = vmatpush1.msra.mxu0 0.0
        %930 = vmatprep.subr.mxu0 0.0
        %931 = vmatpush1.msra.mxu0 0.0
        %932 = vmatprep.subr.mxu0 0.0
        %933 = vmatpush1.msra.mxu0 0.0
        %934 = vmatprep.subr.mxu0 0.0
        %935 = vmatpush1.msra.mxu0 0.0
        %936 = vmatprep.subr.mxu0 0.0
        %937 = vmatpush1.msra.mxu0 0.0
        %938 = vmatprep.subr.mxu0 0.0
        %939 = vmatpush1.msra.mxu0 0.0
        %940 = vmatprep.subr.mxu0 0.0
        %941 = vmatpush1.msra.mxu0 0.0
        %942 = vmatprep.subr.mxu0 0.0
        %943 = vmatpush1.msra.mxu0 0.0
        %944 = vmatprep.subr.mxu0 0.0
        %945 = vmatpush1.msra.mxu0 0.0
        %946 = vmatprep.mubr.f32.mxu0 0.0
        %947 = vmatmul.mubr.f32.gmra.mrb[0].mxu0 %v880
        %v948 = vpop.f32.mrb[0].mxu0
        %v949 = vadd.f32 %v872, %v948
        %v950 = vpop.f32.mrb[0].mxu0
        %v951 = vadd.f32 %v876, %v950
        %952 = vdwg.mxu0
        %v953 = vmul.f32 %v951, 0.5
        %v954 = vmul.f32 %v953, 1.442695
        %v955 = vpow.pop %v954
        %v956 = vmul.f32 %v656, %v955
        %v957 = vadd.f32 %v949, %v956
        %v958 = vld [vmem:[%s10] sm:$0xff]
        %v959 = vld [vmem:[%s10 + $0x8] sm:$0xff]
        %v960 = vld [vmem:[%s10 + $0x10] sm:$0xff]
        %v961 = vld [vmem:[%s10 + $0x18] sm:$0xff]
        %v962 = vld [vmem:[%s10 + $0x20] sm:$0xff]
        %v963 = vld [vmem:[%s10 + $0x28] sm:$0xff]
        %v964 = vld [vmem:[%s10 + $0x30] sm:$0xff]
        %v965 = vld [vmem:[%s10 + $0x38] sm:$0xff]
        %v966 = vld [vmem:[%s10 + $0x40] sm:$0xff]
        %v967 = vld [vmem:[%s10 + $0x48] sm:$0xff]
        %v968 = vld [vmem:[%s10 + $0x50] sm:$0xff]
        %v969 = vld [vmem:[%s10 + $0x58] sm:$0xff]
        %v970 = vld [vmem:[%s10 + $0x60] sm:$0xff]
        %v971 = vld [vmem:[%s10 + $0x68] sm:$0xff]
        %v972 = vld [vmem:[%s10 + $0x70] sm:$0xff]
        %v973 = vld [vmem:[%s10 + $0x78] sm:$0xff]
        %v974 = vld [vmem:[%s11] sm:$0x1]
        %v976 = vlaneseq
        %v977 = vshrl.u32 %v976, 7
        %v978 = vsub.s32 0, %v977
        %v979 = vrot.slane %v974, %v978
        %981 = vmatprep.subr.mxu0 0.0
        %982 = vmatpush1.msra.mxu0 %v958
        %983 = vmatprep.subr.mxu0 0.0
        %984 = vmatpush1.msra.mxu0 %v959
        %985 = vmatprep.subr.mxu0 0.0
        %986 = vmatpush1.msra.mxu0 %v960
        %987 = vmatprep.subr.mxu0 0.0
        %988 = vmatpush1.msra.mxu0 %v961
        %989 = vmatprep.subr.mxu0 0.0
        %990 = vmatpush1.msra.mxu0 %v962
        %991 = vmatprep.subr.mxu0 0.0
        %992 = vmatpush1.msra.mxu0 %v963
        %993 = vmatprep.subr.mxu0 0.0
        %994 = vmatpush1.msra.mxu0 %v964
        %995 = vmatprep.subr.mxu0 0.0
        %996 = vmatpush1.msra.mxu0 %v965
        %997 = vmatprep.subr.mxu0 0.0
        %998 = vmatpush1.msra.mxu0 %v966
        %999 = vmatprep.subr.mxu0 0.0
        %1000 = vmatpush1.msra.mxu0 %v967
        %1001 = vmatprep.subr.mxu0 0.0
        %1002 = vmatpush1.msra.mxu0 %v968
        %1003 = vmatprep.subr.mxu0 0.0
        %1004 = vmatpush1.msra.mxu0 %v969
        %1005 = vmatprep.subr.mxu0 0.0
        %1006 = vmatpush1.msra.mxu0 %v970
        %1007 = vmatprep.subr.mxu0 0.0
        %1008 = vmatpush1.msra.mxu0 %v971
        %1009 = vmatprep.subr.mxu0 0.0
        %1010 = vmatpush1.msra.mxu0 %v972
        %1011 = vmatprep.subr.mxu0 0.0
        %1012 = vmatpush1.msra.mxu0 %v973
        %1013 = vmatprep.subr.mxu0 0.0
        %1014 = vmatpush1.msra.mxu0 0.0
        %1015 = vmatprep.subr.mxu0 0.0
        %1016 = vmatpush1.msra.mxu0 0.0
        %1017 = vmatprep.subr.mxu0 0.0
        %1018 = vmatpush1.msra.mxu0 0.0
        %1019 = vmatprep.subr.mxu0 0.0
        %1020 = vmatpush1.msra.mxu0 0.0
        %1021 = vmatprep.subr.mxu0 0.0
        %1022 = vmatpush1.msra.mxu0 0.0
        %1023 = vmatprep.subr.mxu0 0.0
        %1024 = vmatpush1.msra.mxu0 0.0
        %1025 = vmatprep.subr.mxu0 0.0
        %1026 = vmatpush1.msra.mxu0 0.0
        %1027 = vmatprep.subr.mxu0 0.0
        %1028 = vmatpush1.msra.mxu0 0.0
        %1029 = vmatprep.subr.mxu0 0.0
        %1030 = vmatpush1.msra.mxu0 0.0
        %1031 = vmatprep.subr.mxu0 0.0
        %1032 = vmatpush1.msra.mxu0 0.0
        %1033 = vmatprep.subr.mxu0 0.0
        %1034 = vmatpush1.msra.mxu0 0.0
        %1035 = vmatprep.subr.mxu0 0.0
        %1036 = vmatpush1.msra.mxu0 0.0
        %1037 = vmatprep.subr.mxu0 0.0
        %1038 = vmatpush1.msra.mxu0 0.0
        %1039 = vmatprep.subr.mxu0 0.0
        %1040 = vmatpush1.msra.mxu0 0.0
        %1041 = vmatprep.subr.mxu0 0.0
        %1042 = vmatpush1.msra.mxu0 0.0
        %1043 = vmatprep.subr.mxu0 0.0
        %1044 = vmatpush1.msra.mxu0 0.0
        %1045 = vmatprep.mubr.f32.mxu0 0.0
        %1046 = vmatmul.mubr.f32.gmra.mrb[0].mxu0 %v957
        %v1047 = vpop.f32.mrb[0].mxu0
        %v1048 = vadd.f32 %v979, %v1047
        %v1049 = vpop.f32.mrb[0].mxu0
        %1050 = vdwg.mxu0
        %v1051 = vmax.f32 %v1048, 0.0
        %v1052 = vld [vmem:[%s12] sm:$0xff]
        %v1053 = vld [vmem:[%s12 + $0x8] sm:$0xff]
        %v1054 = vld [vmem:[%s12 + $0x10] sm:$0xff]
        %v1055 = vld [vmem:[%s12 + $0x18] sm:$0xff]
        %v1056 = vld [vmem:[%s13] sm:$0x1]
        %v1058 = vlaneseq
        %v1059 = vshrl.u32 %v1058, 7
        %v1060 = vsub.s32 0, %v1059
        %v1061 = vrot.slane %v1056, %v1060
        %v1064 = vsel %vm668, %v1051, 0
        %1066 = vmatprep.subr.mxu0 0.0
        %1067 = vmatpush1.msra.mxu0 %v1052
        %1068 = vmatprep.subr.mxu0 0.0
        %1069 = vmatpush1.msra.mxu0 %v1053
        %1070 = vmatprep.subr.mxu0 0.0
        %1071 = vmatpush1.msra.mxu0 %v1054
        %1072 = vmatprep.subr.mxu0 0.0
        %1073 = vmatpush1.msra.mxu0 %v1055
        %1074 = vmatprep.subr.mxu0 0.0
        %1075 = vmatpush1.msra.mxu0 0.0
        %1076 = vmatprep.subr.mxu0 0.0
        %1077 = vmatpush1.msra.mxu0 0.0
        %1078 = vmatprep.subr.mxu0 0.0
        %1079 = vmatpush1.msra.mxu0 0.0
        %1080 = vmatprep.subr.mxu0 0.0
        %1081 = vmatpush1.msra.mxu0 0.0
        %1082 = vmatprep.subr.mxu0 0.0
        %1083 = vmatpush1.msra.mxu0 0.0
        %1084 = vmatprep.subr.mxu0 0.0
        %1085 = vmatpush1.msra.mxu0 0.0
        %1086 = vmatprep.subr.mxu0 0.0
        %1087 = vmatpush1.msra.mxu0 0.0
        %1088 = vmatprep.subr.mxu0 0.0
        %1089 = vmatpush1.msra.mxu0 0.0
        %1090 = vmatprep.subr.mxu0 0.0
        %1091 = vmatpush1.msra.mxu0 0.0
        %1092 = vmatprep.subr.mxu0 0.0
        %1093 = vmatpush1.msra.mxu0 0.0
        %1094 = vmatprep.subr.mxu0 0.0
        %1095 = vmatpush1.msra.mxu0 0.0
        %1096 = vmatprep.subr.mxu0 0.0
        %1097 = vmatpush1.msra.mxu0 0.0
        %1098 = vmatprep.subr.mxu0 0.0
        %1099 = vmatpush1.msra.mxu0 0.0
        %1100 = vmatprep.subr.mxu0 0.0
        %1101 = vmatpush1.msra.mxu0 0.0
        %1102 = vmatprep.subr.mxu0 0.0
        %1103 = vmatpush1.msra.mxu0 0.0
        %1104 = vmatprep.subr.mxu0 0.0
        %1105 = vmatpush1.msra.mxu0 0.0
        %1106 = vmatprep.subr.mxu0 0.0
        %1107 = vmatpush1.msra.mxu0 0.0
        %1108 = vmatprep.subr.mxu0 0.0
        %1109 = vmatpush1.msra.mxu0 0.0
        %1110 = vmatprep.subr.mxu0 0.0
        %1111 = vmatpush1.msra.mxu0 0.0
        %1112 = vmatprep.subr.mxu0 0.0
        %1113 = vmatpush1.msra.mxu0 0.0
        %1114 = vmatprep.subr.mxu0 0.0
        %1115 = vmatpush1.msra.mxu0 0.0
        %1116 = vmatprep.subr.mxu0 0.0
        %1117 = vmatpush1.msra.mxu0 0.0
        %1118 = vmatprep.subr.mxu0 0.0
        %1119 = vmatpush1.msra.mxu0 0.0
        %1120 = vmatprep.subr.mxu0 0.0
        %1121 = vmatpush1.msra.mxu0 0.0
        %1122 = vmatprep.subr.mxu0 0.0
        %1123 = vmatpush1.msra.mxu0 0.0
        %1124 = vmatprep.subr.mxu0 0.0
        %1125 = vmatpush1.msra.mxu0 0.0
        %1126 = vmatprep.subr.mxu0 0.0
        %1127 = vmatpush1.msra.mxu0 0.0
        %1128 = vmatprep.subr.mxu0 0.0
        %1129 = vmatpush1.msra.mxu0 0.0
        %1130 = vmatprep.mubr.f32.mxu0 0.0
        %1131 = vmatmul.mubr.f32.gmra.mrb[0].mxu0 %v1064
        %v1132 = vpop.f32.mrb[0].mxu0
        %v1133 = vadd.f32 %v1061, %v1132
        %v1134 = vpop.f32.mrb[0].mxu0
        %1135 = vdwg.mxu0
        %v1136 = vmax.f32 %v1133, 0.0
        %v1137 = vld [vmem:[%s14] sm:$0x1]
        %v1138 = vld [vmem:[%s15] sm:$0x1]
        %v1139 = vsel %vm668, %v1136, 0.0
        %1140 = vadd.xlane.f32.xlu0 %v1139
        %v1141 = vpop.xlane.xlu0 %1140
        %v1142 = vmul.f32 %v1141, %v832
        %v1143 = vmul.f32 %v1136, %v1136
        %v1144 = vsel %vm668, %v1143, 0.0
        %1145 = vadd.xlane.f32.xlu0 %v1144
        %v1146 = vpop.xlane.xlu0 %1145
        %v1147 = vmul.f32 %v1146, %v832
        %v1148 = vmul.f32 %v1142, %v1142
        %v1149 = vsub.f32 %v1147, %v1148
        %v1150 = vadd.f32 %v1149, 1e-05
        %v1151 = vrsqrt.pop %v1150
        %v1152 = vsub.f32 %v1136, %v1142
        %v1153 = vmul.f32 %v1152, %v1151
        %v1155 = vlaneseq
        %v1156 = vshrl.u32 %v1155, 7
        %v1157 = vsub.s32 0, %v1156
        %v1158 = vrot.slane %v1137, %v1157
        %v1160 = vmul.f32 %v1153, %v1158
        %v1162 = vlaneseq
        %v1163 = vshrl.u32 %v1162, 7
        %v1164 = vsub.s32 0, %v1163
        %v1165 = vrot.slane %v1138, %v1164
        %v1167 = vadd.f32 %v1160, %v1165
        %v1168 = vld [vmem:[#allocation8] sm:$0xff]
        %v1169 = vld [vmem:[#allocation8 + $0x8] sm:$0xff]
        %v1170 = vld [vmem:[#allocation8 + $0x10] sm:$0xff]
        %v1171 = vld [vmem:[#allocation8 + $0x18] sm:$0xff]
        %v1172 = vld [vmem:[%s17] sm:$0x1]
        %v1174 = vlaneseq
        %v1175 = vshrl.u32 %v1174, 7
        %v1176 = vsub.s32 0, %v1175
        %v1177 = vrot.slane %v1172, %v1176
        %v1180 = vsel %vm668, %v1167, 0
        %1182 = vmatprep.subr.mxu0 0.0
        %1183 = vmatpush1.msra.mxu0 %v1168
        %1184 = vmatprep.subr.mxu0 0.0
        %1185 = vmatpush1.msra.mxu0 %v1169
        %1186 = vmatprep.subr.mxu0 0.0
        %1187 = vmatpush1.msra.mxu0 %v1170
        %1188 = vmatprep.subr.mxu0 0.0
        %1189 = vmatpush1.msra.mxu0 %v1171
        %1190 = vmatprep.subr.mxu0 0.0
        %1191 = vmatpush1.msra.mxu0 0.0
        %1192 = vmatprep.subr.mxu0 0.0
        %1193 = vmatpush1.msra.mxu0 0.0
        %1194 = vmatprep.subr.mxu0 0.0
        %1195 = vmatpush1.msra.mxu0 0.0
        %1196 = vmatprep.subr.mxu0 0.0
        %1197 = vmatpush1.msra.mxu0 0.0
        %1198 = vmatprep.subr.mxu0 0.0
        %1199 = vmatpush1.msra.mxu0 0.0
        %1200 = vmatprep.subr.mxu0 0.0
        %1201 = vmatpush1.msra.mxu0 0.0
        %1202 = vmatprep.subr.mxu0 0.0
        %1203 = vmatpush1.msra.mxu0 0.0
        %1204 = vmatprep.subr.mxu0 0.0
        %1205 = vmatpush1.msra.mxu0 0.0
        %1206 = vmatprep.subr.mxu0 0.0
        %1207 = vmatpush1.msra.mxu0 0.0
        %1208 = vmatprep.subr.mxu0 0.0
        %1209 = vmatpush1.msra.mxu0 0.0
        %1210 = vmatprep.subr.mxu0 0.0
        %1211 = vmatpush1.msra.mxu0 0.0
        %1212 = vmatprep.subr.mxu0 0.0
        %1213 = vmatpush1.msra.mxu0 0.0
        %1214 = vmatprep.subr.mxu0 0.0
        %1215 = vmatpush1.msra.mxu0 0.0
        %1216 = vmatprep.subr.mxu0 0.0
        %1217 = vmatpush1.msra.mxu0 0.0
        %1218 = vmatprep.subr.mxu0 0.0
        %1219 = vmatpush1.msra.mxu0 0.0
        %1220 = vmatprep.subr.mxu0 0.0
        %1221 = vmatpush1.msra.mxu0 0.0
        %1222 = vmatprep.subr.mxu0 0.0
        %1223 = vmatpush1.msra.mxu0 0.0
        %1224 = vmatprep.subr.mxu0 0.0
        %1225 = vmatpush1.msra.mxu0 0.0
        %1226 = vmatprep.subr.mxu0 0.0
        %1227 = vmatpush1.msra.mxu0 0.0
        %1228 = vmatprep.subr.mxu0 0.0
        %1229 = vmatpush1.msra.mxu0 0.0
        %1230 = vmatprep.subr.mxu0 0.0
        %1231 = vmatpush1.msra.mxu0 0.0
        %1232 = vmatprep.subr.mxu0 0.0
        %1233 = vmatpush1.msra.mxu0 0.0
        %1234 = vmatprep.subr.mxu0 0.0
        %1235 = vmatpush1.msra.mxu0 0.0
        %1236 = vmatprep.subr.mxu0 0.0
        %1237 = vmatpush1.msra.mxu0 0.0
        %1238 = vmatprep.subr.mxu0 0.0
        %1239 = vmatpush1.msra.mxu0 0.0
        %1240 = vmatprep.subr.mxu0 0.0
        %1241 = vmatpush1.msra.mxu0 0.0
        %1242 = vmatprep.subr.mxu0 0.0
        %1243 = vmatpush1.msra.mxu0 0.0
        %1244 = vmatprep.subr.mxu0 0.0
        %1245 = vmatpush1.msra.mxu0 0.0
        %1246 = vmatprep.mubr.f32.mxu0 0.0
        %1247 = vmatmul.mubr.f32.gmra.mrb[0].mxu0 %v1180
        %v1248 = vpop.f32.mrb[0].mxu0
        %v1249 = vadd.f32 %v1177, %v1248
        %v1250 = vpop.f32.mrb[0].mxu0
        %1251 = vdwg.mxu0
        %1252 = vst [vmem:[%s654] sm:$0xff] %v1249
        %1253 = vst [vmem:[%s654 + $0x8] sm:$0xff] %v957
        %1254 = vst [vmem:[%s654 + $0x10] sm:$0xff] %v949
        %1255 = vst [vmem:[%s654 + $0x18] sm:$0xff] %v951
        %s1256 = sand.u32 %s435, 1
        %s1257 = scalar_lea.sflag [#allocation4], %s1256
        %s1258 = sand.u32 %s435, 1
        %s1259 = smul.addr %s1258, 32
        %s1260 = scalar_lea.vmem [#allocation10], %s1259
        // Predicated region
        $region109: #{tpu_custom_call.1} parent=91 // pred_check
          %p1261 = pneg %p445
        $region110: #{tpu_custom_call.1} parent=91 // pred_check_branch
          %1263 = sbr.rel (%p1261) target = $region112
        $region111: #{tpu_custom_call.1} parent=91 // pred_region
          %s1265 = ssub.s32 512, 512
          %1266 = vsyncadd %s1257, %s1265
          %s1267 = smul.addr %s39, 4
          %s1268 = smul.addr %s1267, 128
          %s1269 = scalar_lea.hbm %s18, %s1268
          %s1271 = sshll.u32 %s1260, 4
          %s1272 = int_to_ptr.vmem [resolvable:$true] %s1271
          %1274 = dma.vmem_to_hbm [thread:$0]  %s1272, 512, %s1269, %s1257
        $region112: #{tpu_custom_call.1} parent=91 // pred_fallthru
          _
      $region92: #{tpu_custom_call.1} parent=5 // pred_fallthru
        _
      %p1275 = scmp.le.s32.totalorder 2, %s34
      // Predicated region
      $region113: #{tpu_custom_call.1} parent=5 // pred_check
        %p1276 = pneg %p1275
      $region114: #{tpu_custom_call.1} parent=5 // pred_check_branch
        %1278 = sbr.rel (%p1276) target = $region116
      $region115: #{tpu_custom_call.1} parent=5 // pred_region
        %s1279 = ssub.s32 %s34, 2
        // Predicated region
        $region117: #{tpu_custom_call.1} parent=115 // pred_check
          %p1280 = pneg %p451
        $region118: #{tpu_custom_call.1} parent=115 // pred_check_branch
          %1282 = sbr.rel (%p1280) target = $region120
        $region119: #{tpu_custom_call.1} parent=115 // pred_region
          %s1283 = sand.u32 %s436, 1
          %s1284 = scalar_lea.sflag [#allocation4], %s1283
          %s1285 = sand.u32 %s436, 1
          %s1286 = smul.addr %s1285, 32
          %s1287 = scalar_lea.vmem [#allocation10], %s1286
          %1288 = dma.done %s1284, 512
        $region120: #{tpu_custom_call.1} parent=115 // pred_fallthru
          _
      $region116: #{tpu_custom_call.1} parent=5 // pred_fallthru
        _
    $region6: #{tpu_custom_call.1} parent=1 // loop_footer
      %s38 = sadd.s32 1, %s34
    $region7: #{tpu_custom_call.1} parent=1 // loop_footer_branch
      %33 = sbr.rel target = $region3
    $region8: #{tpu_custom_call.1} parent=1 // loop_exit
      _
    %1289 = vsyncpa [#allocation3], 1
    %s1290 = scalar_lea.sflag [#allocation3], 1
    %1291 = vsyncpa %s1290, 1
    %1292 = vsyncpa [#allocation6], 1
    %s1293 = scalar_lea.sflag [#allocation6], 1
    %1294 = vsyncpa %s1293, 1
    %1295 = vsyncpa [#allocation9], 1
    %1296 = vsyncpa [#allocation4], 1
    %s1297 = scalar_lea.sflag [#allocation4], 1
    %1298 = vsyncpa %s1297, 1

</llo_original>
